<compile_context>
chip_gen: v5e
topology: v5e:2x2
jax: 0.10.0
libtpu: 0.0.40
codegen_flags: <defaults>
</compile_context>

<pallas_src>
import functools

import jax
import jax.numpy as jnp
from jax import lax
from jax.experimental import pallas as pl
from jax.experimental.pallas import tpu as pltpu


def head_kernel(x_ref, wqkv_ref, bias_ref, o_ref, *, hs_pad, approx_recip, compute_dtype):
    b_blk, T, C = x_ref.shape
    rows = b_blk * T

    # ---- fused Q/K/V projection: one lane-dense (rows, C) @ (C, 3*hs_pad) MXU matmul ----
    xc = x_ref[...].reshape(rows, C)                 # already compute_dtype (cast at boundary)
    qkv = jnp.dot(xc, wqkv_ref[...], preferred_element_type=compute_dtype)

    q = qkv[:, :hs_pad]                              # 1/sqrt(hs) already folded into Wq
    k = qkv[:, hs_pad:2 * hs_pad]                    # all slices 128-lane-tile aligned
    v = qkv[:, 2 * hs_pad:]

    # ---- flattened batch-block attention: one (rows, rows) score matmul ----
    # Cross-batch pairs and future positions are killed by the precomputed additive bias
    # (0 where attendable, -1e30 elsewhere), so one big MXU tile replaces b_blk tiny ones.
    scores = lax.dot_general(q, k, (((1,), (1,)), ((), ())),        # q @ k^T
                             preferred_element_type=jnp.float32)
    scores = scores + bias_ref[...]

    # ---- numerically stable softmax in f32 ----
    scores = scores - jnp.max(scores, axis=-1, keepdims=True)
    p = jnp.exp(scores)
    denom = jnp.sum(p, axis=-1, keepdims=True)
    if approx_recip:
        p = p * pl.reciprocal(denom, approx=True)    # EUP slot (bf16 fast path)
    else:
        p = p / denom                                # exact divide (f32 parity path)
    # TODO(synk): attention-weight dropout skipped (eval-mode identity).

    # ---- weighted value aggregation ----
    out = jnp.dot(p.astype(compute_dtype), v, preferred_element_type=jnp.float32)
    o_ref[...] = out.reshape(b_blk, T, hs_pad).astype(o_ref.dtype)   # lane-dense 128-wide store


def _default_b_blk(B, T):
    """Pick a batch block: rows = b_blk*T near 256 (MXU M tile), grid >= 2 when B >= 2."""
    divisors = [d for d in range(1, B + 1) if B % d == 0]

    def score(d):
        rows, grid = d * T, B // d
        return ((grid >= 2) or (B < 2), rows <= 512, -abs(rows - 256))

    return max(divisors, key=score)


def head_forward(x, wq, wk, wv, *, b_blk=None, compute_dtype=jnp.bfloat16,
                 approx_recip=None, out_dtype=None):
    """x: (B, T, C); wq/wk/wv: (C, hs) == nn.Linear weight transposed."""
    B, T, C = x.shape
    hs = wq.shape[1]
    hs_pad = ((hs + 127) // 128) * 128               # lane-tile-aligned projection width

    if b_blk is None:
        b_blk = _default_b_blk(B, T)
    assert B % b_blk == 0, "batch must be divisible by the batch block"
    rows = b_blk * T

    if approx_recip is None:
        approx_recip = jnp.dtype(compute_dtype) == jnp.dtype(jnp.bfloat16)
    if out_dtype is None:
        out_dtype = compute_dtype

    # Fold 1/sqrt(hs) into Wq, zero-pad each projection to hs_pad lanes, pack lane-dense.
    scale = float(hs) ** -0.5

    def _pad(w):
        return jnp.pad(w, ((0, 0), (0, hs_pad - hs))) if hs_pad != hs else w

    wqkv = jnp.concatenate([_pad(wq * scale), _pad(wk), _pad(wv)], axis=1).astype(compute_dtype)

    # Block-diagonal + causal additive bias, built once in the wrapper (hoisted out of
    # the per-step kernel body).  Finite -1e30 => no -inf/NaN risk, diagonal always kept.
    bi = jnp.arange(rows, dtype=jnp.int32) // T
    ti = jnp.arange(rows, dtype=jnp.int32) % T
    keep = (bi[:, None] == bi[None, :]) & (ti[:, None] >= ti[None, :])
    bias = jnp.where(keep, 0.0, -1e30).astype(jnp.float32)

    x_in = x.astype(compute_dtype)                   # bf16 activations at the boundary

    kernel = functools.partial(head_kernel, hs_pad=hs_pad,
                               approx_recip=approx_recip, compute_dtype=compute_dtype)

    out_pad = pl.pallas_call(
        kernel,
        out_shape=jax.ShapeDtypeStruct((B, T, hs_pad), out_dtype),
        grid_spec=pltpu.PrefetchScalarGridSpec(
            num_scalar_prefetch=0,
            grid=(B // b_blk,),
            in_specs=[
                pl.BlockSpec((b_blk, T, C), lambda b: (b, 0, 0)),     # activations
                pl.BlockSpec((C, 3 * hs_pad), lambda b: (0, 0)),      # packed QKV weight (resident)
                pl.BlockSpec((rows, rows), lambda b: (0, 0)),         # block-diag causal bias (resident)
            ],
            out_specs=pl.BlockSpec((b_blk, T, hs_pad), lambda b: (b, 0, 0)),
        ),
        compiler_params=pltpu.CompilerParams(
            # batch axis is data-parallel -> megacore / v7x dual-TC sharding
            dimension_semantics=("parallel",),
        ),
    )(x_in, wqkv, bias)

    return out_pad[:, :, :hs] if hs_pad != hs else out_pad


# ------------------- pure-JAX reference (PyTorch Head semantics) -------------------
def head_reference(x, wq, wk, wv):
    T = x.shape[1]
    hs = wq.shape[1]
    q = x @ wq
    k = x @ wk
    v = x @ wv
    wei = (q @ jnp.swapaxes(k, -1, -2)) * hs ** -0.5
    mask = jnp.tril(jnp.ones((T, T), bool))
    wei = jnp.where(mask, wei, -jnp.inf)
    wei = jax.nn.softmax(wei, axis=-1)
    return wei @ v


if __name__ == "__main__":
    # Shapes consistent with the module: n_embd=384, T <= block_size=256.
    B, T, C, head_size = 8, 32, 384, 64

    key = jax.random.PRNGKey(0)
    kx, kq, kk, kv = jax.random.split(key, 4)
    x = jax.random.normal(kx, (B, T, C), jnp.float32)
    s = 0.02
    wq = s * jax.random.normal(kq, (C, head_size), jnp.float32)
    wk = s * jax.random.normal(kk, (C, head_size), jnp.float32)
    wv = s * jax.random.normal(kv, (C, head_size), jnp.float32)

    ref = head_reference(x, wq, wk, wv)

    # f32 strict-parity path (exact divide, f32 everywhere).
    out_f32 = head_forward(x, wq, wk, wv, compute_dtype=jnp.float32)
    out_f32 = jax.block_until_ready(out_f32)
    assert out_f32.shape == (B, T, head_size)
    assert jnp.allclose(out_f32, ref, atol=2e-3, rtol=2e-3), "f32 kernel mismatch vs reference"

    # bf16 default fast path (bf16 activations/weights/output, f32 accumulation + softmax).
    out_bf16 = head_forward(x, wq, wk, wv)
    out_bf16 = jax.block_until_ready(out_bf16)
    assert out_bf16.shape == (B, T, head_size)
    assert jnp.allclose(out_bf16.astype(jnp.float32), ref, atol=3e-2, rtol=3e-2), \
        "bf16 kernel mismatch vs reference"

    print("KERNEL_OK")
</pallas_src>

<mosaic_0001>
module attributes {stable_mosaic.version = 11 : i64} {
  func.func @head_kernel(%arg0: i32, %arg1: memref<4x32x384xf32, #tpu.memory_space<vmem>>, %arg2: memref<384x384xf32, #tpu.memory_space<vmem>>, %arg3: memref<128x128xf32, #tpu.memory_space<vmem>>, %arg4: memref<4x32x128xf32, #tpu.memory_space<vmem>>) attributes {dimension_semantics = [#tpu.dimension_semantics<parallel>], iteration_bounds = array<i64: 2>, scalar_prefetch = 0 : i64, scratch_operands = 0 : i64, tpu.core_type = #tpu.core_type<tc>, window_params = [{transform_indices = @transform_0, window_bounds = array<i64: 4, 32, 384>}, {pipeline_mode = #tpu.pipeline_mode<synchronous>, transform_indices = @transform_1, window_bounds = array<i64: 384, 384>}, {pipeline_mode = #tpu.pipeline_mode<synchronous>, transform_indices = @transform_2, window_bounds = array<i64: 128, 128>}, {transform_indices = @transform_3, window_bounds = array<i64: 4, 32, 128>}]} {
    %c0 = arith.constant 0 : index
    %c0_0 = arith.constant 0 : index
    %c0_1 = arith.constant 0 : index
    %0 = vector.load %arg1[%c0, %c0_0, %c0_1] : memref<4x32x384xf32, #tpu.memory_space<vmem>>, vector<4x32x384xf32>
    %1 = vector.shape_cast %0 : vector<4x32x384xf32> to vector<128x384xf32>
    %c0_2 = arith.constant 0 : index
    %c0_3 = arith.constant 0 : index
    %2 = vector.load %arg2[%c0_2, %c0_3] : memref<384x384xf32, #tpu.memory_space<vmem>>, vector<384x384xf32>
    %cst = arith.constant dense<0.000000e+00> : vector<128x384xf32>
    %3 = tpu.matmul %1, %2, %cst {dimension_numbers = #tpu.dot_dimension_numbers<[1], [0], [0], [1], [0, 0, 1, 1], [], []>} : vector<128x384xf32>, vector<384x384xf32>, vector<128x384xf32> -> vector<128x384xf32>
    %4 = vector.extract_strided_slice %3 {offsets = [0, 0], sizes = [128, 128], strides = [1, 1]} : vector<128x384xf32> to vector<128x128xf32>
    %5 = vector.extract_strided_slice %3 {offsets = [0, 128], sizes = [128, 128], strides = [1, 1]} : vector<128x384xf32> to vector<128x128xf32>
    %6 = vector.extract_strided_slice %3 {offsets = [0, 256], sizes = [128, 128], strides = [1, 1]} : vector<128x384xf32> to vector<128x128xf32>
    %cst_4 = arith.constant dense<0.000000e+00> : vector<128x128xf32>
    %7 = tpu.matmul %4, %5, %cst_4 {dimension_numbers = #tpu.dot_dimension_numbers<[1], [1], [0], [0], [0, 0, 1, 0], [], []>} : vector<128x128xf32>, vector<128x128xf32>, vector<128x128xf32> -> vector<128x128xf32>
    %c0_5 = arith.constant 0 : index
    %c0_6 = arith.constant 0 : index
    %8 = vector.load %arg3[%c0_5, %c0_6] : memref<128x128xf32, #tpu.memory_space<vmem>>, vector<128x128xf32>
    %9 = arith.addf %7, %8 : vector<128x128xf32>
    %cst_7 = arith.constant dense<0xFF800000> : vector<128xf32>
    %10 = vector.multi_reduction <maximumf>, %9, %cst_7 [1] : vector<128x128xf32> to vector<128xf32>
    %11 = vector.shape_cast %10 : vector<128xf32> to vector<128x1xf32>
    %12 = vector.broadcast %11 : vector<128x1xf32> to vector<128x128xf32>
    %13 = arith.subf %9, %12 : vector<128x128xf32>
    %14 = math.exp %13 : vector<128x128xf32>
    %cst_8 = arith.constant dense<0.000000e+00> : vector<128xf32>
    %15 = vector.multi_reduction <add>, %14, %cst_8 [1] : vector<128x128xf32> to vector<128xf32>
    %16 = vector.shape_cast %15 : vector<128xf32> to vector<128x1xf32>
    %17 = vector.broadcast %16 : vector<128x1xf32> to vector<128x128xf32>
    %18 = arith.divf %14, %17 : vector<128x128xf32>
    %cst_9 = arith.constant dense<0.000000e+00> : vector<128x128xf32>
    %19 = tpu.matmul %18, %6, %cst_9 {dimension_numbers = #tpu.dot_dimension_numbers<[1], [0], [0], [1], [0, 0, 1, 1], [], []>} : vector<128x128xf32>, vector<128x128xf32>, vector<128x128xf32> -> vector<128x128xf32>
    %20 = vector.shape_cast %19 : vector<128x128xf32> to vector<4x32x128xf32>
    %c0_10 = arith.constant 0 : index
    %c0_11 = arith.constant 0 : index
    %c0_12 = arith.constant 0 : index
    %21 = vector.load %arg4[%c0_10, %c0_11, %c0_12] : memref<4x32x128xf32, #tpu.memory_space<vmem>>, vector<4x32x128xf32>
    tpu.vector_store %arg4[%c0_10, %c0_11, %c0_12], %20 {strides = array<i32>} : memref<4x32x128xf32, #tpu.memory_space<vmem>>, vector<4x32x128xf32>,
    return
  }
  func.func @transform_0(%arg0: i32) -> (i32, i32, i32) {
    %c0_i32 = arith.constant 0 : i32
    %c0_i32_0 = arith.constant 0 : i32
    %c0_i32_1 = arith.constant 0 : i32
    return %arg0, %c0_i32, %c0_i32_0 : i32, i32, i32
  }
  func.func @transform_1(%arg0: i32) -> (i32, i32) {
    %c0_i32 = arith.constant 0 : i32
    %c0_i32_0 = arith.constant 0 : i32
    %c0_i32_1 = arith.constant 0 : i32
    return %c0_i32, %c0_i32_0 : i32, i32
  }
  func.func @transform_2(%arg0: i32) -> (i32, i32) {
    %c0_i32 = arith.constant 0 : i32
    %c0_i32_0 = arith.constant 0 : i32
    %c0_i32_1 = arith.constant 0 : i32
    return %c0_i32, %c0_i32_0 : i32, i32
  }
  func.func @transform_3(%arg0: i32) -> (i32, i32, i32) {
    %c0_i32 = arith.constant 0 : i32
    %c0_i32_0 = arith.constant 0 : i32
    %c0_i32_1 = arith.constant 0 : i32
    return %arg0, %c0_i32, %c0_i32_0 : i32, i32, i32
  }
}

</mosaic_0001>

<llo_original>
// kernel: tpu_custom_call.1
$region0: #{tpu_custom_call.1}
  #allocation0 [shape = 'u32[]', space=smem, size = 0x4, offset = 0x4, fixed_abs, tag = 'smem constant byte address 0x4 - core index']
  #allocation1 [shape = 'u32[72,128]{1,0:T(1,128)}', space=vmem, size = 0x9000, scoped, tag = 'internal scratch']
  %s0 = inlined_call_operand.hbm [shape: f32[8,32,384], index: 0, kind: input, shape index: {}]
  %s1 = inlined_call_operand.hbm [shape: f32[384,384], index: 1, kind: input, shape index: {}]
  %s2 = inlined_call_operand.hbm [shape: f32[128,128], index: 2, kind: input, shape index: {}]
  %s3 = inlined_call_operand.hbm [shape: f32[8,32,128], index: 3, kind: output, shape index: {}]
  %s4 = sld [smem:[#allocation0]]
  $region57: #{tpu_custom_call.1} parent=0
    _
  %s6 = ssub.s32 1, %s4
  %s7 = scalar_select 0, %s6, %s4
  $region1: #{tpu_custom_call.1} parent=0
    #allocation2 [shape = 'u8[393216]{0}', space=vmem, size = 0x60000, scoped, tag = 'input window, operand 0']
    #allocation3 [shape = 's32[2]{0}', space=sflag, size = 0x8, scoped, tag = 'scoped memory for tpu_custom_call.1']
    #allocation4 [shape = 's32[2]{0}', space=sflag, size = 0x8, scoped, tag = 'scoped memory for tpu_custom_call.1']
    #allocation5 [shape = 'u8[589824]{0}', space=vmem, size = 0x90000, scoped, tag = 'input window, operand 1, single buffered']
    #allocation6 [shape = 's32[1]{0}', space=sflag, size = 0x4, scoped, tag = 'scoped memory for tpu_custom_call.1']
    #allocation7 [shape = 'u8[65536]{0}', space=vmem, size = 0x10000, scoped, tag = 'input window, operand 2, single buffered']
    #allocation8 [shape = 'u8[131072]{0}', space=vmem, size = 0x20000, scoped, tag = 'output window, operand 0']
    %8 = vsyncpa [#allocation3], 0
    %s9 = scalar_lea.sflag [#allocation3], 1
    %10 = vsyncpa %s9, 0
    %11 = vsyncpa [#allocation6], 0
    %12 = vsyncpa [#allocation4], 0
    %s13 = scalar_lea.sflag [#allocation4], 1
    %14 = vsyncpa %s13, 0
    loop: start=0, step=1, limit=4
    $region2: #{tpu_custom_call.1} parent=1 // loop_pre_header
      _
    $region3: #{tpu_custom_call.1} parent=1 // loop_header
      %s16 = sphi 0, %s20
      %p17 = scmp.ge.s32.totalorder %s16, 4
      %s26 = sphi 0, %s28
      %s29 = sphi 0, %s26
      %s30 = sphi 0, %s29
      %s46 = sphi 0, %s30
      %s50 = sphi 0, %s50
      %s52 = sphi 0, %s50
      %s53 = sphi 0, %s52
      %s67 = sphi 0, %s53
      %s71 = sphi 0, %s71
      %s73 = sphi 0, %s71
      %s74 = sphi 0, %s73
      %s88 = sphi 0, %s74
      %s94 = sphi 0, %s96
      %s97 = sphi 0, %s94
      %s98 = sphi 0, %s97
      %s114 = sphi 0, %s98
    $region4: #{tpu_custom_call.1} parent=1 // loop_header_branch
      %19 = sbr.rel (%p17) target = $region8
    $region5: #{tpu_custom_call.1} parent=1 // loop_body
      %s21 = ssub.s32 %s16, 1
      %s22 = ssub.s32 %s16, 2
      %s23 = sadd.s32 %s16, 1
      %s24 = ssub.s32 %s16, %s23
      %p25 = scmp.eq.s32.totalorder %s24, 0
      %s27 = sadd.s32 %s26, 1
      %s28 = scalar_select %p25, %s26, %s27
      %p31 = pneg %p25
      %p32 = scmp.eq.s32.totalorder %s16, 1
      %p33 = por %p31, %p32
      %p34 = scmp.ne.s32.totalorder %s26, %s29
      %p35 = scmp.eq.s32.totalorder %s16, 0
      %p36 = por %p34, %p35
      %p37 = scmp.ne.s32.totalorder %s26, %s29
      %p38 = scmp.eq.s32.totalorder %s21, 1
      %p39 = por %p37, %p38
      %p40 = scmp.ne.s32.totalorder %s29, %s30
      %p41 = scmp.eq.s32.totalorder %s21, 0
      %p42 = por %p40, %p41
      %p43 = scmp.ne.s32.totalorder %s29, %s30
      %p44 = scmp.eq.s32.totalorder %s22, 1
      %p45 = por %p43, %p44
      %p47 = scmp.ne.s32.totalorder %s30, %s46
      %p48 = scmp.eq.s32.totalorder %s22, 0
      %p49 = por %p47, %p48
      %s51 = sadd.s32 %s50, 1
      %p54 = scmp.eq.s32.totalorder %s16, 1
      %p55 = scmp.ne.s32.totalorder %s50, %s52
      %p56 = scmp.eq.s32.totalorder %s16, 0
      %p57 = por %p55, %p56
      %p58 = scmp.ne.s32.totalorder %s50, %s52
      %p59 = scmp.eq.s32.totalorder %s21, 1
      %p60 = por %p58, %p59
      %p61 = scmp.ne.s32.totalorder %s52, %s53
      %p62 = scmp.eq.s32.totalorder %s21, 0
      %p63 = por %p61, %p62
      %p64 = scmp.ne.s32.totalorder %s52, %s53
      %p65 = scmp.eq.s32.totalorder %s22, 1
      %p66 = por %p64, %p65
      %p68 = scmp.ne.s32.totalorder %s53, %s67
      %p69 = scmp.eq.s32.totalorder %s22, 0
      %p70 = por %p68, %p69
      %s72 = sadd.s32 %s71, 1
      %p75 = scmp.eq.s32.totalorder %s16, 1
      %p76 = scmp.ne.s32.totalorder %s71, %s73
      %p77 = scmp.eq.s32.totalorder %s16, 0
      %p78 = por %p76, %p77
      %p79 = scmp.ne.s32.totalorder %s71, %s73
      %p80 = scmp.eq.s32.totalorder %s21, 1
      %p81 = por %p79, %p80
      %p82 = scmp.ne.s32.totalorder %s73, %s74
      %p83 = scmp.eq.s32.totalorder %s21, 0
      %p84 = por %p82, %p83
      %p85 = scmp.ne.s32.totalorder %s73, %s74
      %p86 = scmp.eq.s32.totalorder %s22, 1
      %p87 = por %p85, %p86
      %p89 = scmp.ne.s32.totalorder %s74, %s88
      %p90 = scmp.eq.s32.totalorder %s22, 0
      %p91 = por %p89, %p90
      %s92 = ssub.s32 %s16, %s23
      %p93 = scmp.eq.s32.totalorder %s92, 0
      %s95 = sadd.s32 %s94, 1
      %s96 = scalar_select %p93, %s94, %s95
      %p99 = pneg %p93
      %p100 = scmp.eq.s32.totalorder %s16, 1
      %p101 = por %p99, %p100
      %p102 = scmp.ne.s32.totalorder %s94, %s97
      %p103 = scmp.eq.s32.totalorder %s16, 0
      %p104 = por %p102, %p103
      %p105 = scmp.ne.s32.totalorder %s94, %s97
      %p106 = scmp.eq.s32.totalorder %s21, 1
      %p107 = por %p105, %p106
      %p108 = scmp.ne.s32.totalorder %s97, %s98
      %p109 = scmp.eq.s32.totalorder %s21, 0
      %p110 = por %p108, %p109
      %p111 = scmp.ne.s32.totalorder %s97, %s98
      %p112 = scmp.eq.s32.totalorder %s22, 1
      %p113 = por %p111, %p112
      %p115 = scmp.ne.s32.totalorder %s98, %s114
      %p116 = scmp.eq.s32.totalorder %s22, 0
      %p117 = por %p115, %p116
      %p118 = scmp.le.s32.totalorder 1, %s16
      %p119 = scmp.lt.s32.totalorder %s16, 3
      %p120 = pnand %p118, %p119
      %p121 = pneg %p120
      // Predicated region
      $region9: #{tpu_custom_call.1} parent=5 // pred_check
        _
      $region10: #{tpu_custom_call.1} parent=5 // pred_check_branch
        %123 = sbr.rel (%p120) target = $region12
      $region11: #{tpu_custom_call.1} parent=5 // pred_region
        %s124 = ssub.s32 %s16, 1
        // Predicated region
        $region13: #{tpu_custom_call.1} parent=11 // pred_check
          %p125 = pneg %p63
        $region14: #{tpu_custom_call.1} parent=11 // pred_check_branch
          %127 = sbr.rel (%p125) target = $region16
        $region15: #{tpu_custom_call.1} parent=11 // pred_region
          %129 = vsyncadd [#allocation6], 0
          %s130 = sshll.u32 %s1, 4
          %s131 = int_to_ptr.hbm [resolvable:$true] %s130
          %s132 = sshll.u32 [#allocation5], 4
          %s133 = int_to_ptr.vmem [resolvable:$true] %s132
          %138 = dma.hbm_to_vmem [thread:$0]  %s131, 18432, %s133, [#allocation6], 384, 384, 24
        $region16: #{tpu_custom_call.1} parent=11 // pred_fallthru
          _
        // Predicated region
        $region17: #{tpu_custom_call.1} parent=11 // pred_check
          %p139 = pneg %p84
        $region18: #{tpu_custom_call.1} parent=11 // pred_check_branch
          %141 = sbr.rel (%p139) target = $region20
        $region19: #{tpu_custom_call.1} parent=11 // pred_region
          %143 = vsyncadd [#allocation6], 0
          %s144 = sshll.u32 %s2, 4
          %s145 = int_to_ptr.hbm [resolvable:$true] %s144
          %s146 = sshll.u32 [#allocation7], 4
          %s147 = int_to_ptr.vmem [resolvable:$true] %s146
          %152 = dma.hbm_to_vmem [thread:$0]  %s145, 2048, %s147, [#allocation6], 128, 128, 8
        $region20: #{tpu_custom_call.1} parent=11 // pred_fallthru
          _
      $region12: #{tpu_custom_call.1} parent=5 // pred_fallthru
        _
      %p153 = scmp.lt.s32.totalorder %s16, 2
      // Predicated region
      $region21: #{tpu_custom_call.1} parent=5 // pred_check
        %p154 = pneg %p153
      $region22: #{tpu_custom_call.1} parent=5 // pred_check_branch
        %156 = sbr.rel (%p154) target = $region24
      $region23: #{tpu_custom_call.1} parent=5 // pred_region
        // Predicated region
        $region25: #{tpu_custom_call.1} parent=23 // pred_check
          %p157 = pneg %p36
        $region26: #{tpu_custom_call.1} parent=23 // pred_check_branch
          %159 = sbr.rel (%p157) target = $region28
        $region27: #{tpu_custom_call.1} parent=23 // pred_region
          %s160 = sand.u32 %s26, 1
          %s161 = scalar_lea.sflag [#allocation3], %s160
          %s162 = sand.u32 %s26, 1
          %s163 = smul.addr %s162, 384
          %s164 = scalar_lea.vmem [#allocation2], %s163
          %s165 = smul.u32 4, %s16
          %167 = vsyncadd %s161, 0
          %s168 = smul.addr %s165, 12
          %s169 = smul.addr %s168, 8
          %s170 = scalar_lea.hbm %s0, %s169
          %s171 = sshll.u32 %s170, 4
          %s172 = int_to_ptr.hbm [resolvable:$true] %s171
          %s173 = sshll.u32 %s164, 4
          %s174 = int_to_ptr.vmem [resolvable:$true] %s173
          %179 = dma.hbm_to_vmem [thread:$0]  %s172, 6144, %s174, %s161, 384, 384, 24
        $region28: #{tpu_custom_call.1} parent=23 // pred_fallthru
          _
      $region24: #{tpu_custom_call.1} parent=5 // pred_fallthru
        _
      %p180 = scmp.le.s32.totalorder 1, %s16
      %p181 = scmp.lt.s32.totalorder %s16, 3
      %p182 = pnand %p180, %p181
      %p183 = pneg %p182
      // Predicated region
      $region29: #{tpu_custom_call.1} parent=5 // pred_check
        _
      $region30: #{tpu_custom_call.1} parent=5 // pred_check_branch
        %185 = sbr.rel (%p182) target = $region32
      $region31: #{tpu_custom_call.1} parent=5 // pred_region
        %s186 = ssub.s32 %s16, 1
        %s187 = sand.u32 %s29, 1
        %s188 = scalar_lea.sflag [#allocation3], %s187
        %s189 = sand.u32 %s29, 1
        %s190 = smul.addr %s189, 384
        %s191 = scalar_lea.vmem [#allocation2], %s190
        // Predicated region
        $region33: #{tpu_custom_call.1} parent=31 // pred_check
          %p192 = pneg %p42
        $region34: #{tpu_custom_call.1} parent=31 // pred_check_branch
          %194 = sbr.rel (%p192) target = $region36
        $region35: #{tpu_custom_call.1} parent=31 // pred_region
          %196 = dma.done %s188, 6144
        $region36: #{tpu_custom_call.1} parent=31 // pred_fallthru
          _
        // Predicated region
        $region37: #{tpu_custom_call.1} parent=31 // pred_check
          %p197 = pneg %p63
        $region38: #{tpu_custom_call.1} parent=31 // pred_check_branch
          %199 = sbr.rel (%p197) target = $region40
        $region39: #{tpu_custom_call.1} parent=31 // pred_region
          %201 = dma.done [#allocation6], 18432
        $region40: #{tpu_custom_call.1} parent=31 // pred_fallthru
          _
        // Predicated region
        $region41: #{tpu_custom_call.1} parent=31 // pred_check
          %p202 = pneg %p84
        $region42: #{tpu_custom_call.1} parent=31 // pred_check_branch
          %204 = sbr.rel (%p202) target = $region44
        $region43: #{tpu_custom_call.1} parent=31 // pred_region
          %206 = dma.done [#allocation6], 2048
        $region44: #{tpu_custom_call.1} parent=31 // pred_fallthru
          _
        %s207 = sand.u32 %s29, 1
        %s208 = scalar_lea.sflag [#allocation3], %s207
        %s209 = sand.u32 %s29, 1
        %s210 = smul.addr %s209, 384
        %s211 = scalar_lea.vmem [#allocation2], %s210
        %p212 = pneg %p42
        %p213 = pneg %p39
        %p214 = pneg %p63
        %p215 = pneg %p60
        %p216 = pneg %p84
        %p217 = pneg %p81
        %p218 = pneg %p110
        %p219 = pneg %p107
        %s220 = sand.u32 %s97, 1
        %s221 = scalar_lea.sflag [#allocation4], %s220
        %s222 = sand.u32 %s97, 1
        %s223 = smul.addr %s222, 128
        %s224 = scalar_lea.vmem [#allocation8], %s223
        %s225 = smul.u32 4, %s21
        %s226 = smul.u32 4, %s21
        %v227 = vld [vmem:[%s191] sm:$0xff]
        %v228 = vld [vmem:[%s191 + $0x8] sm:$0xff]
        %v229 = vld [vmem:[%s191 + $0x10] sm:$0xff]
        %v230 = vld [vmem:[%s191 + $0x18] sm:$0xff]
        %v231 = vld [vmem:[%s191 + $0x20] sm:$0xff]
        %v232 = vld [vmem:[%s191 + $0x28] sm:$0xff]
        %v233 = vld [vmem:[%s191 + $0x30] sm:$0xff]
        %v234 = vld [vmem:[%s191 + $0x38] sm:$0xff]
        %v235 = vld [vmem:[%s191 + $0x40] sm:$0xff]
        %v236 = vld [vmem:[%s191 + $0x48] sm:$0xff]
        %v237 = vld [vmem:[%s191 + $0x50] sm:$0xff]
        %v238 = vld [vmem:[%s191 + $0x58] sm:$0xff]
        %v239 = vld [vmem:[%s191 + $0x60] sm:$0xff]
        %v240 = vld [vmem:[%s191 + $0x68] sm:$0xff]
        %v241 = vld [vmem:[%s191 + $0x70] sm:$0xff]
        %v242 = vld [vmem:[%s191 + $0x78] sm:$0xff]
        %v243 = vld [vmem:[%s191 + $0x80] sm:$0xff]
        %v244 = vld [vmem:[%s191 + $0x88] sm:$0xff]
        %v245 = vld [vmem:[%s191 + $0x90] sm:$0xff]
        %v246 = vld [vmem:[%s191 + $0x98] sm:$0xff]
        %v247 = vld [vmem:[%s191 + $0xa0] sm:$0xff]
        %v248 = vld [vmem:[%s191 + $0xa8] sm:$0xff]
        %v249 = vld [vmem:[%s191 + $0xb0] sm:$0xff]
        %v250 = vld [vmem:[%s191 + $0xb8] sm:$0xff]
        %v251 = vld [vmem:[%s191 + $0xc0] sm:$0xff]
        %v252 = vld [vmem:[%s191 + $0xc8] sm:$0xff]
        %v253 = vld [vmem:[%s191 + $0xd0] sm:$0xff]
        %v254 = vld [vmem:[%s191 + $0xd8] sm:$0xff]
        %v255 = vld [vmem:[%s191 + $0xe0] sm:$0xff]
        %v256 = vld [vmem:[%s191 + $0xe8] sm:$0xff]
        %v257 = vld [vmem:[%s191 + $0xf0] sm:$0xff]
        %v258 = vld [vmem:[%s191 + $0xf8] sm:$0xff]
        %v259 = vld [vmem:[%s191 + $0x100] sm:$0xff]
        %v260 = vld [vmem:[%s191 + $0x108] sm:$0xff]
        %v261 = vld [vmem:[%s191 + $0x110] sm:$0xff]
        %v262 = vld [vmem:[%s191 + $0x118] sm:$0xff]
        %v263 = vld [vmem:[%s191 + $0x120] sm:$0xff]
        %v264 = vld [vmem:[%s191 + $0x128] sm:$0xff]
        %v265 = vld [vmem:[%s191 + $0x130] sm:$0xff]
        %v266 = vld [vmem:[%s191 + $0x138] sm:$0xff]
        %v267 = vld [vmem:[%s191 + $0x140] sm:$0xff]
        %v268 = vld [vmem:[%s191 + $0x148] sm:$0xff]
        %v269 = vld [vmem:[%s191 + $0x150] sm:$0xff]
        %v270 = vld [vmem:[%s191 + $0x158] sm:$0xff]
        %v271 = vld [vmem:[%s191 + $0x160] sm:$0xff]
        %v272 = vld [vmem:[%s191 + $0x168] sm:$0xff]
        %v273 = vld [vmem:[%s191 + $0x170] sm:$0xff]
        %v274 = vld [vmem:[%s191 + $0x178] sm:$0xff]
        %v275 = vld [vmem:[#allocation5] sm:$0xff]
        %v276 = vld [vmem:[#allocation5 + $0x8] sm:$0xff]
        %v277 = vld [vmem:[#allocation5 + $0x10] sm:$0xff]
        %v278 = vld [vmem:[#allocation5 + $0x18] sm:$0xff]
        %v279 = vld [vmem:[#allocation5 + $0x20] sm:$0xff]
        %v280 = vld [vmem:[#allocation5 + $0x28] sm:$0xff]
        %v281 = vld [vmem:[#allocation5 + $0x30] sm:$0xff]
        %v282 = vld [vmem:[#allocation5 + $0x38] sm:$0xff]
        %v283 = vld [vmem:[#allocation5 + $0x40] sm:$0xff]
        %v284 = vld [vmem:[#allocation5 + $0x48] sm:$0xff]
        %v285 = vld [vmem:[#allocation5 + $0x50] sm:$0xff]
        %v286 = vld [vmem:[#allocation5 + $0x58] sm:$0xff]
        %v287 = vld [vmem:[#allocation5 + $0x60] sm:$0xff]
        %v288 = vld [vmem:[#allocation5 + $0x68] sm:$0xff]
        %v289 = vld [vmem:[#allocation5 + $0x70] sm:$0xff]
        %v290 = vld [vmem:[#allocation5 + $0x78] sm:$0xff]
        %v291 = vld [vmem:[#allocation5 + $0x80] sm:$0xff]
        %v292 = vld [vmem:[#allocation5 + $0x88] sm:$0xff]
        %v293 = vld [vmem:[#allocation5 + $0x90] sm:$0xff]
        %v294 = vld [vmem:[#allocation5 + $0x98] sm:$0xff]
        %v295 = vld [vmem:[#allocation5 + $0xa0] sm:$0xff]
        %v296 = vld [vmem:[#allocation5 + $0xa8] sm:$0xff]
        %v297 = vld [vmem:[#allocation5 + $0xb0] sm:$0xff]
        %v298 = vld [vmem:[#allocation5 + $0xb8] sm:$0xff]
        %v299 = vld [vmem:[#allocation5 + $0xc0] sm:$0xff]
        %v300 = vld [vmem:[#allocation5 + $0xc8] sm:$0xff]
        %v301 = vld [vmem:[#allocation5 + $0xd0] sm:$0xff]
        %v302 = vld [vmem:[#allocation5 + $0xd8] sm:$0xff]
        %v303 = vld [vmem:[#allocation5 + $0xe0] sm:$0xff]
        %v304 = vld [vmem:[#allocation5 + $0xe8] sm:$0xff]
        %v305 = vld [vmem:[#allocation5 + $0xf0] sm:$0xff]
        %v306 = vld [vmem:[#allocation5 + $0xf8] sm:$0xff]
        %v307 = vld [vmem:[#allocation5 + $0x100] sm:$0xff]
        %v308 = vld [vmem:[#allocation5 + $0x108] sm:$0xff]
        %v309 = vld [vmem:[#allocation5 + $0x110] sm:$0xff]
        %v310 = vld [vmem:[#allocation5 + $0x118] sm:$0xff]
        %v311 = vld [vmem:[#allocation5 + $0x120] sm:$0xff]
        %v312 = vld [vmem:[#allocation5 + $0x128] sm:$0xff]
        %v313 = vld [vmem:[#allocation5 + $0x130] sm:$0xff]
        %v314 = vld [vmem:[#allocation5 + $0x138] sm:$0xff]
        %v315 = vld [vmem:[#allocation5 + $0x140] sm:$0xff]
        %v316 = vld [vmem:[#allocation5 + $0x148] sm:$0xff]
        %v317 = vld [vmem:[#allocation5 + $0x150] sm:$0xff]
        %v318 = vld [vmem:[#allocation5 + $0x158] sm:$0xff]
        %v319 = vld [vmem:[#allocation5 + $0x160] sm:$0xff]
        %v320 = vld [vmem:[#allocation5 + $0x168] sm:$0xff]
        %v321 = vld [vmem:[#allocation5 + $0x170] sm:$0xff]
        %v322 = vld [vmem:[#allocation5 + $0x178] sm:$0xff]
        %v323 = vld [vmem:[#allocation5 + $0x180] sm:$0xff]
        %v324 = vld [vmem:[#allocation5 + $0x188] sm:$0xff]
        %v325 = vld [vmem:[#allocation5 + $0x190] sm:$0xff]
        %v326 = vld [vmem:[#allocation5 + $0x198] sm:$0xff]
        %v327 = vld [vmem:[#allocation5 + $0x1a0] sm:$0xff]
        %v328 = vld [vmem:[#allocation5 + $0x1a8] sm:$0xff]
        %v329 = vld [vmem:[#allocation5 + $0x1b0] sm:$0xff]
        %v330 = vld [vmem:[#allocation5 + $0x1b8] sm:$0xff]
        %v331 = vld [vmem:[#allocation5 + $0x1c0] sm:$0xff]
        %v332 = vld [vmem:[#allocation5 + $0x1c8] sm:$0xff]
        %v333 = vld [vmem:[#allocation5 + $0x1d0] sm:$0xff]
        %v334 = vld [vmem:[#allocation5 + $0x1d8] sm:$0xff]
        %v335 = vld [vmem:[#allocation5 + $0x1e0] sm:$0xff]
        %v336 = vld [vmem:[#allocation5 + $0x1e8] sm:$0xff]
        %v337 = vld [vmem:[#allocation5 + $0x1f0] sm:$0xff]
        %v338 = vld [vmem:[#allocation5 + $0x1f8] sm:$0xff]
        %v339 = vld [vmem:[#allocation5 + $0x200] sm:$0xff]
        %v340 = vld [vmem:[#allocation5 + $0x208] sm:$0xff]
        %v341 = vld [vmem:[#allocation5 + $0x210] sm:$0xff]
        %v342 = vld [vmem:[#allocation5 + $0x218] sm:$0xff]
        %v343 = vld [vmem:[#allocation5 + $0x220] sm:$0xff]
        %v344 = vld [vmem:[#allocation5 + $0x228] sm:$0xff]
        %v345 = vld [vmem:[#allocation5 + $0x230] sm:$0xff]
        %v346 = vld [vmem:[#allocation5 + $0x238] sm:$0xff]
        %v347 = vld [vmem:[#allocation5 + $0x240] sm:$0xff]
        %v348 = vld [vmem:[#allocation5 + $0x248] sm:$0xff]
        %v349 = vld [vmem:[#allocation5 + $0x250] sm:$0xff]
        %v350 = vld [vmem:[#allocation5 + $0x258] sm:$0xff]
        %v351 = vld [vmem:[#allocation5 + $0x260] sm:$0xff]
        %v352 = vld [vmem:[#allocation5 + $0x268] sm:$0xff]
        %v353 = vld [vmem:[#allocation5 + $0x270] sm:$0xff]
        %v354 = vld [vmem:[#allocation5 + $0x278] sm:$0xff]
        %v355 = vld [vmem:[#allocation5 + $0x280] sm:$0xff]
        %v356 = vld [vmem:[#allocation5 + $0x288] sm:$0xff]
        %v357 = vld [vmem:[#allocation5 + $0x290] sm:$0xff]
        %v358 = vld [vmem:[#allocation5 + $0x298] sm:$0xff]
        %v359 = vld [vmem:[#allocation5 + $0x2a0] sm:$0xff]
        %v360 = vld [vmem:[#allocation5 + $0x2a8] sm:$0xff]
        %v361 = vld [vmem:[#allocation5 + $0x2b0] sm:$0xff]
        %v362 = vld [vmem:[#allocation5 + $0x2b8] sm:$0xff]
        %v363 = vld [vmem:[#allocation5 + $0x2c0] sm:$0xff]
        %v364 = vld [vmem:[#allocation5 + $0x2c8] sm:$0xff]
        %v365 = vld [vmem:[#allocation5 + $0x2d0] sm:$0xff]
        %v366 = vld [vmem:[#allocation5 + $0x2d8] sm:$0xff]
        %v367 = vld [vmem:[#allocation5 + $0x2e0] sm:$0xff]
        %v368 = vld [vmem:[#allocation5 + $0x2e8] sm:$0xff]
        %v369 = vld [vmem:[#allocation5 + $0x2f0] sm:$0xff]
        %v370 = vld [vmem:[#allocation5 + $0x2f8] sm:$0xff]
        %v371 = vld [vmem:[#allocation5 + $0x300] sm:$0xff]
        %v372 = vld [vmem:[#allocation5 + $0x308] sm:$0xff]
        %v373 = vld [vmem:[#allocation5 + $0x310] sm:$0xff]
        %v374 = vld [vmem:[#allocation5 + $0x318] sm:$0xff]
        %v375 = vld [vmem:[#allocation5 + $0x320] sm:$0xff]
        %v376 = vld [vmem:[#allocation5 + $0x328] sm:$0xff]
        %v377 = vld [vmem:[#allocation5 + $0x330] sm:$0xff]
        %v378 = vld [vmem:[#allocation5 + $0x338] sm:$0xff]
        %v379 = vld [vmem:[#allocation5 + $0x340] sm:$0xff]
        %v380 = vld [vmem:[#allocation5 + $0x348] sm:$0xff]
        %v381 = vld [vmem:[#allocation5 + $0x350] sm:$0xff]
        %v382 = vld [vmem:[#allocation5 + $0x358] sm:$0xff]
        %v383 = vld [vmem:[#allocation5 + $0x360] sm:$0xff]
        %v384 = vld [vmem:[#allocation5 + $0x368] sm:$0xff]
        %v385 = vld [vmem:[#allocation5 + $0x370] sm:$0xff]
        %v386 = vld [vmem:[#allocation5 + $0x378] sm:$0xff]
        %v387 = vld [vmem:[#allocation5 + $0x380] sm:$0xff]
        %v388 = vld [vmem:[#allocation5 + $0x388] sm:$0xff]
        %v389 = vld [vmem:[#allocation5 + $0x390] sm:$0xff]
        %v390 = vld [vmem:[#allocation5 + $0x398] sm:$0xff]
        %v391 = vld [vmem:[#allocation5 + $0x3a0] sm:$0xff]
        %v392 = vld [vmem:[#allocation5 + $0x3a8] sm:$0xff]
        %v393 = vld [vmem:[#allocation5 + $0x3b0] sm:$0xff]
        %v394 = vld [vmem:[#allocation5 + $0x3b8] sm:$0xff]
        %v395 = vld [vmem:[#allocation5 + $0x3c0] sm:$0xff]
        %v396 = vld [vmem:[#allocation5 + $0x3c8] sm:$0xff]
        %v397 = vld [vmem:[#allocation5 + $0x3d0] sm:$0xff]
        %v398 = vld [vmem:[#allocation5 + $0x3d8] sm:$0xff]
        %v399 = vld [vmem:[#allocation5 + $0x3e0] sm:$0xff]
        %v400 = vld [vmem:[#allocation5 + $0x3e8] sm:$0xff]
        %v401 = vld [vmem:[#allocation5 + $0x3f0] sm:$0xff]
        %v402 = vld [vmem:[#allocation5 + $0x3f8] sm:$0xff]
        %v403 = vld [vmem:[#allocation5 + $0x400] sm:$0xff]
        %v404 = vld [vmem:[#allocation5 + $0x408] sm:$0xff]
        %v405 = vld [vmem:[#allocation5 + $0x410] sm:$0xff]
        %v406 = vld [vmem:[#allocation5 + $0x418] sm:$0xff]
        %v407 = vld [vmem:[#allocation5 + $0x420] sm:$0xff]
        %v408 = vld [vmem:[#allocation5 + $0x428] sm:$0xff]
        %v409 = vld [vmem:[#allocation5 + $0x430] sm:$0xff]
        %v410 = vld [vmem:[#allocation5 + $0x438] sm:$0xff]
        %v411 = vld [vmem:[#allocation5 + $0x440] sm:$0xff]
        %v412 = vld [vmem:[#allocation5 + $0x448] sm:$0xff]
        %v413 = vld [vmem:[#allocation5 + $0x450] sm:$0xff]
        %v414 = vld [vmem:[#allocation5 + $0x458] sm:$0xff]
        %v415 = vld [vmem:[#allocation5 + $0x460] sm:$0xff]
        %v416 = vld [vmem:[#allocation5 + $0x468] sm:$0xff]
        %v417 = vld [vmem:[#allocation5 + $0x470] sm:$0xff]
        %v418 = vld [vmem:[#allocation5 + $0x478] sm:$0xff]
        %419 = vmatpush.msra.mxu0 %v320
        %420 = vmatpush.msra.mxu0 %v317
        %421 = vmatpush.msra.mxu0 %v314
        %422 = vmatpush.msra.mxu0 %v311
        %423 = vmatpush.msra.mxu0 %v308
        %424 = vmatpush.msra.mxu0 %v305
        %425 = vmatpush.msra.mxu0 %v302
        %426 = vmatpush.msra.mxu0 %v299
        %427 = vmatpush.msra.mxu0 %v296
        %428 = vmatpush.msra.mxu0 %v293
        %429 = vmatpush.msra.mxu0 %v290
        %430 = vmatpush.msra.mxu0 %v287
        %431 = vmatpush.msra.mxu0 %v284
        %432 = vmatpush.msra.mxu0 %v281
        %433 = vmatpush.msra.mxu0 %v278
        %434 = vmatpush.msra.mxu0 %v275
        %435 = vmatmul.f32.gmra.mxu0 %v227
        %v436 = vpop.f32.mrf.mxu0
        %v437 = vadd.f32 0.0, %v436
        %438 = vmatmul.f32.gmra.mxu0 %v230
        %v439 = vpop.f32.mrf.mxu0
        %v440 = vadd.f32 0.0, %v439
        %441 = vmatmul.f32.gmra.mxu0 %v233
        %v442 = vpop.f32.mrf.mxu0
        %v443 = vadd.f32 0.0, %v442
        %444 = vmatmul.f32.gmra.mxu0 %v236
        %v445 = vpop.f32.mrf.mxu0
        %v446 = vadd.f32 0.0, %v445
        %447 = vmatmul.f32.gmra.mxu0 %v239
        %v448 = vpop.f32.mrf.mxu0
        %v449 = vadd.f32 0.0, %v448
        %450 = vmatmul.f32.gmra.mxu0 %v242
        %v451 = vpop.f32.mrf.mxu0
        %v452 = vadd.f32 0.0, %v451
        %453 = vmatmul.f32.gmra.mxu0 %v245
        %v454 = vpop.f32.mrf.mxu0
        %v455 = vadd.f32 0.0, %v454
        %456 = vmatmul.f32.gmra.mxu0 %v248
        %v457 = vpop.f32.mrf.mxu0
        %v458 = vadd.f32 0.0, %v457
        %459 = vmatmul.f32.gmra.mxu0 %v251
        %v460 = vpop.f32.mrf.mxu0
        %v461 = vadd.f32 0.0, %v460
        %462 = vmatmul.f32.gmra.mxu0 %v254
        %v463 = vpop.f32.mrf.mxu0
        %v464 = vadd.f32 0.0, %v463
        %465 = vmatmul.f32.gmra.mxu0 %v257
        %v466 = vpop.f32.mrf.mxu0
        %v467 = vadd.f32 0.0, %v466
        %468 = vmatmul.f32.gmra.mxu0 %v260
        %v469 = vpop.f32.mrf.mxu0
        %v470 = vadd.f32 0.0, %v469
        %471 = vmatmul.f32.gmra.mxu0 %v263
        %v472 = vpop.f32.mrf.mxu0
        %v473 = vadd.f32 0.0, %v472
        %474 = vmatmul.f32.gmra.mxu0 %v266
        %v475 = vpop.f32.mrf.mxu0
        %v476 = vadd.f32 0.0, %v475
        %477 = vmatmul.f32.gmra.mxu0 %v269
        %v478 = vpop.f32.mrf.mxu0
        %v479 = vadd.f32 0.0, %v478
        %480 = vmatmul.f32.gmra.mxu0 %v272
        %v481 = vpop.f32.mrf.mxu0
        %v482 = vadd.f32 0.0, %v481
        %483 = vdwg.mxu0
        %484 = vmatpush.msra.mxu0 %v368
        %485 = vmatpush.msra.mxu0 %v365
        %486 = vmatpush.msra.mxu0 %v362
        %487 = vmatpush.msra.mxu0 %v359
        %488 = vmatpush.msra.mxu0 %v356
        %489 = vmatpush.msra.mxu0 %v353
        %490 = vmatpush.msra.mxu0 %v350
        %491 = vmatpush.msra.mxu0 %v347
        %492 = vmatpush.msra.mxu0 %v344
        %493 = vmatpush.msra.mxu0 %v341
        %494 = vmatpush.msra.mxu0 %v338
        %495 = vmatpush.msra.mxu0 %v335
        %496 = vmatpush.msra.mxu0 %v332
        %497 = vmatpush.msra.mxu0 %v329
        %498 = vmatpush.msra.mxu0 %v326
        %499 = vmatpush.msra.mxu0 %v323
        %500 = vmatmul.f32.gmra.mxu0 %v228
        %v501 = vpop.f32.mrf.mxu0
        %v502 = vadd.f32 %v437, %v501
        %503 = vmatmul.f32.gmra.mxu0 %v231
        %v504 = vpop.f32.mrf.mxu0
        %v505 = vadd.f32 %v440, %v504
        %506 = vmatmul.f32.gmra.mxu0 %v234
        %v507 = vpop.f32.mrf.mxu0
        %v508 = vadd.f32 %v443, %v507
        %509 = vmatmul.f32.gmra.mxu0 %v237
        %v510 = vpop.f32.mrf.mxu0
        %v511 = vadd.f32 %v446, %v510
        %512 = vmatmul.f32.gmra.mxu0 %v240
        %v513 = vpop.f32.mrf.mxu0
        %v514 = vadd.f32 %v449, %v513
        %515 = vmatmul.f32.gmra.mxu0 %v243
        %v516 = vpop.f32.mrf.mxu0
        %v517 = vadd.f32 %v452, %v516
        %518 = vmatmul.f32.gmra.mxu0 %v246
        %v519 = vpop.f32.mrf.mxu0
        %v520 = vadd.f32 %v455, %v519
        %521 = vmatmul.f32.gmra.mxu0 %v249
        %v522 = vpop.f32.mrf.mxu0
        %v523 = vadd.f32 %v458, %v522
        %524 = vmatmul.f32.gmra.mxu0 %v252
        %v525 = vpop.f32.mrf.mxu0
        %v526 = vadd.f32 %v461, %v525
        %527 = vmatmul.f32.gmra.mxu0 %v255
        %v528 = vpop.f32.mrf.mxu0
        %v529 = vadd.f32 %v464, %v528
        %530 = vmatmul.f32.gmra.mxu0 %v258
        %v531 = vpop.f32.mrf.mxu0
        %v532 = vadd.f32 %v467, %v531
        %533 = vmatmul.f32.gmra.mxu0 %v261
        %v534 = vpop.f32.mrf.mxu0
        %v535 = vadd.f32 %v470, %v534
        %536 = vmatmul.f32.gmra.mxu0 %v264
        %v537 = vpop.f32.mrf.mxu0
        %v538 = vadd.f32 %v473, %v537
        %539 = vmatmul.f32.gmra.mxu0 %v267
        %v540 = vpop.f32.mrf.mxu0
        %v541 = vadd.f32 %v476, %v540
        %542 = vmatmul.f32.gmra.mxu0 %v270
        %v543 = vpop.f32.mrf.mxu0
        %v544 = vadd.f32 %v479, %v543
        %545 = vmatmul.f32.gmra.mxu0 %v273
        %v546 = vpop.f32.mrf.mxu0
        %v547 = vadd.f32 %v482, %v546
        %548 = vdwg.mxu0
        %549 = vmatpush.msra.mxu0 %v416
        %550 = vmatpush.msra.mxu0 %v413
        %551 = vmatpush.msra.mxu0 %v410
        %552 = vmatpush.msra.mxu0 %v407
        %553 = vmatpush.msra.mxu0 %v404
        %554 = vmatpush.msra.mxu0 %v401
        %555 = vmatpush.msra.mxu0 %v398
        %556 = vmatpush.msra.mxu0 %v395
        %557 = vmatpush.msra.mxu0 %v392
        %558 = vmatpush.msra.mxu0 %v389
        %559 = vmatpush.msra.mxu0 %v386
        %560 = vmatpush.msra.mxu0 %v383
        %561 = vmatpush.msra.mxu0 %v380
        %562 = vmatpush.msra.mxu0 %v377
        %563 = vmatpush.msra.mxu0 %v374
        %564 = vmatpush.msra.mxu0 %v371
        %565 = vmatmul.f32.gmra.mxu0 %v229
        %v566 = vpop.f32.mrf.mxu0
        %v567 = vadd.f32 %v502, %v566
        %568 = vmatmul.f32.gmra.mxu0 %v232
        %v569 = vpop.f32.mrf.mxu0
        %v570 = vadd.f32 %v505, %v569
        %571 = vmatmul.f32.gmra.mxu0 %v235
        %v572 = vpop.f32.mrf.mxu0
        %v573 = vadd.f32 %v508, %v572
        %574 = vmatmul.f32.gmra.mxu0 %v238
        %v575 = vpop.f32.mrf.mxu0
        %v576 = vadd.f32 %v511, %v575
        %577 = vmatmul.f32.gmra.mxu0 %v241
        %v578 = vpop.f32.mrf.mxu0
        %v579 = vadd.f32 %v514, %v578
        %580 = vmatmul.f32.gmra.mxu0 %v244
        %v581 = vpop.f32.mrf.mxu0
        %v582 = vadd.f32 %v517, %v581
        %583 = vmatmul.f32.gmra.mxu0 %v247
        %v584 = vpop.f32.mrf.mxu0
        %v585 = vadd.f32 %v520, %v584
        %586 = vmatmul.f32.gmra.mxu0 %v250
        %v587 = vpop.f32.mrf.mxu0
        %v588 = vadd.f32 %v523, %v587
        %589 = vmatmul.f32.gmra.mxu0 %v253
        %v590 = vpop.f32.mrf.mxu0
        %v591 = vadd.f32 %v526, %v590
        %592 = vmatmul.f32.gmra.mxu0 %v256
        %v593 = vpop.f32.mrf.mxu0
        %v594 = vadd.f32 %v529, %v593
        %595 = vmatmul.f32.gmra.mxu0 %v259
        %v596 = vpop.f32.mrf.mxu0
        %v597 = vadd.f32 %v532, %v596
        %598 = vmatmul.f32.gmra.mxu0 %v262
        %v599 = vpop.f32.mrf.mxu0
        %v600 = vadd.f32 %v535, %v599
        %601 = vmatmul.f32.gmra.mxu0 %v265
        %v602 = vpop.f32.mrf.mxu0
        %v603 = vadd.f32 %v538, %v602
        %604 = vmatmul.f32.gmra.mxu0 %v268
        %v605 = vpop.f32.mrf.mxu0
        %v606 = vadd.f32 %v541, %v605
        %607 = vmatmul.f32.gmra.mxu0 %v271
        %v608 = vpop.f32.mrf.mxu0
        %v609 = vadd.f32 %v544, %v608
        %610 = vmatmul.f32.gmra.mxu0 %v274
        %v611 = vpop.f32.mrf.mxu0
        %v612 = vadd.f32 %v547, %v611
        %613 = vdwg.mxu0
        %614 = vmatpush.msra.mxu0 %v321
        %615 = vmatpush.msra.mxu0 %v318
        %616 = vmatpush.msra.mxu0 %v315
        %617 = vmatpush.msra.mxu0 %v312
        %618 = vmatpush.msra.mxu0 %v309
        %619 = vmatpush.msra.mxu0 %v306
        %620 = vmatpush.msra.mxu0 %v303
        %621 = vmatpush.msra.mxu0 %v300
        %622 = vmatpush.msra.mxu0 %v297
        %623 = vmatpush.msra.mxu0 %v294
        %624 = vmatpush.msra.mxu0 %v291
        %625 = vmatpush.msra.mxu0 %v288
        %626 = vmatpush.msra.mxu0 %v285
        %627 = vmatpush.msra.mxu0 %v282
        %628 = vmatpush.msra.mxu0 %v279
        %629 = vmatpush.msra.mxu0 %v276
        %630 = vmatmul.f32.gmra.mxu0 %v227
        %v631 = vpop.f32.mrf.mxu0
        %v632 = vadd.f32 0.0, %v631
        %633 = vmatmul.f32.gmra.mxu0 %v230
        %v634 = vpop.f32.mrf.mxu0
        %v635 = vadd.f32 0.0, %v634
        %636 = vmatmul.f32.gmra.mxu0 %v233
        %v637 = vpop.f32.mrf.mxu0
        %v638 = vadd.f32 0.0, %v637
        %639 = vmatmul.f32.gmra.mxu0 %v236
        %v640 = vpop.f32.mrf.mxu0
        %v641 = vadd.f32 0.0, %v640
        %642 = vmatmul.f32.gmra.mxu0 %v239
        %v643 = vpop.f32.mrf.mxu0
        %v644 = vadd.f32 0.0, %v643
        %645 = vmatmul.f32.gmra.mxu0 %v242
        %v646 = vpop.f32.mrf.mxu0
        %v647 = vadd.f32 0.0, %v646
        %648 = vmatmul.f32.gmra.mxu0 %v245
        %v649 = vpop.f32.mrf.mxu0
        %v650 = vadd.f32 0.0, %v649
        %651 = vmatmul.f32.gmra.mxu0 %v248
        %v652 = vpop.f32.mrf.mxu0
        %v653 = vadd.f32 0.0, %v652
        %654 = vmatmul.f32.gmra.mxu0 %v251
        %v655 = vpop.f32.mrf.mxu0
        %v656 = vadd.f32 0.0, %v655
        %657 = vmatmul.f32.gmra.mxu0 %v254
        %v658 = vpop.f32.mrf.mxu0
        %v659 = vadd.f32 0.0, %v658
        %660 = vmatmul.f32.gmra.mxu0 %v257
        %v661 = vpop.f32.mrf.mxu0
        %v662 = vadd.f32 0.0, %v661
        %663 = vmatmul.f32.gmra.mxu0 %v260
        %v664 = vpop.f32.mrf.mxu0
        %v665 = vadd.f32 0.0, %v664
        %666 = vmatmul.f32.gmra.mxu0 %v263
        %v667 = vpop.f32.mrf.mxu0
        %v668 = vadd.f32 0.0, %v667
        %669 = vmatmul.f32.gmra.mxu0 %v266
        %v670 = vpop.f32.mrf.mxu0
        %v671 = vadd.f32 0.0, %v670
        %672 = vmatmul.f32.gmra.mxu0 %v269
        %v673 = vpop.f32.mrf.mxu0
        %v674 = vadd.f32 0.0, %v673
        %675 = vmatmul.f32.gmra.mxu0 %v272
        %v676 = vpop.f32.mrf.mxu0
        %v677 = vadd.f32 0.0, %v676
        %678 = vdwg.mxu0
        %679 = vmatpush.msra.mxu0 %v369
        %680 = vmatpush.msra.mxu0 %v366
        %681 = vmatpush.msra.mxu0 %v363
        %682 = vmatpush.msra.mxu0 %v360
        %683 = vmatpush.msra.mxu0 %v357
        %684 = vmatpush.msra.mxu0 %v354
        %685 = vmatpush.msra.mxu0 %v351
        %686 = vmatpush.msra.mxu0 %v348
        %687 = vmatpush.msra.mxu0 %v345
        %688 = vmatpush.msra.mxu0 %v342
        %689 = vmatpush.msra.mxu0 %v339
        %690 = vmatpush.msra.mxu0 %v336
        %691 = vmatpush.msra.mxu0 %v333
        %692 = vmatpush.msra.mxu0 %v330
        %693 = vmatpush.msra.mxu0 %v327
        %694 = vmatpush.msra.mxu0 %v324
        %695 = vmatmul.f32.gmra.mxu0 %v228
        %v696 = vpop.f32.mrf.mxu0
        %v697 = vadd.f32 %v632, %v696
        %698 = vmatmul.f32.gmra.mxu0 %v231
        %v699 = vpop.f32.mrf.mxu0
        %v700 = vadd.f32 %v635, %v699
        %701 = vmatmul.f32.gmra.mxu0 %v234
        %v702 = vpop.f32.mrf.mxu0
        %v703 = vadd.f32 %v638, %v702
        %704 = vmatmul.f32.gmra.mxu0 %v237
        %v705 = vpop.f32.mrf.mxu0
        %v706 = vadd.f32 %v641, %v705
        %707 = vmatmul.f32.gmra.mxu0 %v240
        %v708 = vpop.f32.mrf.mxu0
        %v709 = vadd.f32 %v644, %v708
        %710 = vmatmul.f32.gmra.mxu0 %v243
        %v711 = vpop.f32.mrf.mxu0
        %v712 = vadd.f32 %v647, %v711
        %713 = vmatmul.f32.gmra.mxu0 %v246
        %v714 = vpop.f32.mrf.mxu0
        %v715 = vadd.f32 %v650, %v714
        %716 = vmatmul.f32.gmra.mxu0 %v249
        %v717 = vpop.f32.mrf.mxu0
        %v718 = vadd.f32 %v653, %v717
        %719 = vmatmul.f32.gmra.mxu0 %v252
        %v720 = vpop.f32.mrf.mxu0
        %v721 = vadd.f32 %v656, %v720
        %722 = vmatmul.f32.gmra.mxu0 %v255
        %v723 = vpop.f32.mrf.mxu0
        %v724 = vadd.f32 %v659, %v723
        %725 = vmatmul.f32.gmra.mxu0 %v258
        %v726 = vpop.f32.mrf.mxu0
        %v727 = vadd.f32 %v662, %v726
        %728 = vmatmul.f32.gmra.mxu0 %v261
        %v729 = vpop.f32.mrf.mxu0
        %v730 = vadd.f32 %v665, %v729
        %731 = vmatmul.f32.gmra.mxu0 %v264
        %v732 = vpop.f32.mrf.mxu0
        %v733 = vadd.f32 %v668, %v732
        %734 = vmatmul.f32.gmra.mxu0 %v267
        %v735 = vpop.f32.mrf.mxu0
        %v736 = vadd.f32 %v671, %v735
        %737 = vmatmul.f32.gmra.mxu0 %v270
        %v738 = vpop.f32.mrf.mxu0
        %v739 = vadd.f32 %v674, %v738
        %740 = vmatmul.f32.gmra.mxu0 %v273
        %v741 = vpop.f32.mrf.mxu0
        %v742 = vadd.f32 %v677, %v741
        %743 = vdwg.mxu0
        %744 = vmatpush.msra.mxu0 %v417
        %745 = vmatpush.msra.mxu0 %v414
        %746 = vmatpush.msra.mxu0 %v411
        %747 = vmatpush.msra.mxu0 %v408
        %748 = vmatpush.msra.mxu0 %v405
        %749 = vmatpush.msra.mxu0 %v402
        %750 = vmatpush.msra.mxu0 %v399
        %751 = vmatpush.msra.mxu0 %v396
        %752 = vmatpush.msra.mxu0 %v393
        %753 = vmatpush.msra.mxu0 %v390
        %754 = vmatpush.msra.mxu0 %v387
        %755 = vmatpush.msra.mxu0 %v384
        %756 = vmatpush.msra.mxu0 %v381
        %757 = vmatpush.msra.mxu0 %v378
        %758 = vmatpush.msra.mxu0 %v375
        %759 = vmatpush.msra.mxu0 %v372
        %760 = vmatmul.f32.gmra.mxu0 %v229
        %v761 = vpop.f32.mrf.mxu0
        %v762 = vadd.f32 %v697, %v761
        %763 = vmatmul.f32.gmra.mxu0 %v232
        %v764 = vpop.f32.mrf.mxu0
        %v765 = vadd.f32 %v700, %v764
        %766 = vmatmul.f32.gmra.mxu0 %v235
        %v767 = vpop.f32.mrf.mxu0
        %v768 = vadd.f32 %v703, %v767
        %769 = vmatmul.f32.gmra.mxu0 %v238
        %v770 = vpop.f32.mrf.mxu0
        %v771 = vadd.f32 %v706, %v770
        %772 = vmatmul.f32.gmra.mxu0 %v241
        %v773 = vpop.f32.mrf.mxu0
        %v774 = vadd.f32 %v709, %v773
        %775 = vmatmul.f32.gmra.mxu0 %v244
        %v776 = vpop.f32.mrf.mxu0
        %v777 = vadd.f32 %v712, %v776
        %778 = vmatmul.f32.gmra.mxu0 %v247
        %v779 = vpop.f32.mrf.mxu0
        %v780 = vadd.f32 %v715, %v779
        %781 = vmatmul.f32.gmra.mxu0 %v250
        %v782 = vpop.f32.mrf.mxu0
        %v783 = vadd.f32 %v718, %v782
        %784 = vmatmul.f32.gmra.mxu0 %v253
        %v785 = vpop.f32.mrf.mxu0
        %v786 = vadd.f32 %v721, %v785
        %787 = vmatmul.f32.gmra.mxu0 %v256
        %v788 = vpop.f32.mrf.mxu0
        %v789 = vadd.f32 %v724, %v788
        %790 = vmatmul.f32.gmra.mxu0 %v259
        %v791 = vpop.f32.mrf.mxu0
        %v792 = vadd.f32 %v727, %v791
        %793 = vmatmul.f32.gmra.mxu0 %v262
        %v794 = vpop.f32.mrf.mxu0
        %v795 = vadd.f32 %v730, %v794
        %796 = vmatmul.f32.gmra.mxu0 %v265
        %v797 = vpop.f32.mrf.mxu0
        %v798 = vadd.f32 %v733, %v797
        %799 = vmatmul.f32.gmra.mxu0 %v268
        %v800 = vpop.f32.mrf.mxu0
        %v801 = vadd.f32 %v736, %v800
        %802 = vmatmul.f32.gmra.mxu0 %v271
        %v803 = vpop.f32.mrf.mxu0
        %v804 = vadd.f32 %v739, %v803
        %805 = vmatmul.f32.gmra.mxu0 %v274
        %v806 = vpop.f32.mrf.mxu0
        %v807 = vadd.f32 %v742, %v806
        %808 = vdwg.mxu0
        %809 = vmatpush.msra.mxu0 %v322
        %810 = vmatpush.msra.mxu0 %v319
        %811 = vmatpush.msra.mxu0 %v316
        %812 = vmatpush.msra.mxu0 %v313
        %813 = vmatpush.msra.mxu0 %v310
        %814 = vmatpush.msra.mxu0 %v307
        %815 = vmatpush.msra.mxu0 %v304
        %816 = vmatpush.msra.mxu0 %v301
        %817 = vmatpush.msra.mxu0 %v298
        %818 = vmatpush.msra.mxu0 %v295
        %819 = vmatpush.msra.mxu0 %v292
        %820 = vmatpush.msra.mxu0 %v289
        %821 = vmatpush.msra.mxu0 %v286
        %822 = vmatpush.msra.mxu0 %v283
        %823 = vmatpush.msra.mxu0 %v280
        %824 = vmatpush.msra.mxu0 %v277
        %825 = vmatmul.f32.gmra.mxu0 %v227
        %v826 = vpop.f32.mrf.mxu0
        %v827 = vadd.f32 0.0, %v826
        %828 = vmatmul.f32.gmra.mxu0 %v230
        %v829 = vpop.f32.mrf.mxu0
        %v830 = vadd.f32 0.0, %v829
        %831 = vmatmul.f32.gmra.mxu0 %v233
        %v832 = vpop.f32.mrf.mxu0
        %v833 = vadd.f32 0.0, %v832
        %834 = vmatmul.f32.gmra.mxu0 %v236
        %v835 = vpop.f32.mrf.mxu0
        %v836 = vadd.f32 0.0, %v835
        %837 = vmatmul.f32.gmra.mxu0 %v239
        %v838 = vpop.f32.mrf.mxu0
        %v839 = vadd.f32 0.0, %v838
        %840 = vmatmul.f32.gmra.mxu0 %v242
        %v841 = vpop.f32.mrf.mxu0
        %v842 = vadd.f32 0.0, %v841
        %843 = vmatmul.f32.gmra.mxu0 %v245
        %v844 = vpop.f32.mrf.mxu0
        %v845 = vadd.f32 0.0, %v844
        %846 = vmatmul.f32.gmra.mxu0 %v248
        %v847 = vpop.f32.mrf.mxu0
        %v848 = vadd.f32 0.0, %v847
        %849 = vmatmul.f32.gmra.mxu0 %v251
        %v850 = vpop.f32.mrf.mxu0
        %v851 = vadd.f32 0.0, %v850
        %852 = vmatmul.f32.gmra.mxu0 %v254
        %v853 = vpop.f32.mrf.mxu0
        %v854 = vadd.f32 0.0, %v853
        %855 = vmatmul.f32.gmra.mxu0 %v257
        %v856 = vpop.f32.mrf.mxu0
        %v857 = vadd.f32 0.0, %v856
        %858 = vmatmul.f32.gmra.mxu0 %v260
        %v859 = vpop.f32.mrf.mxu0
        %v860 = vadd.f32 0.0, %v859
        %861 = vmatmul.f32.gmra.mxu0 %v263
        %v862 = vpop.f32.mrf.mxu0
        %v863 = vadd.f32 0.0, %v862
        %864 = vmatmul.f32.gmra.mxu0 %v266
        %v865 = vpop.f32.mrf.mxu0
        %v866 = vadd.f32 0.0, %v865
        %867 = vmatmul.f32.gmra.mxu0 %v269
        %v868 = vpop.f32.mrf.mxu0
        %v869 = vadd.f32 0.0, %v868
        %870 = vmatmul.f32.gmra.mxu0 %v272
        %v871 = vpop.f32.mrf.mxu0
        %v872 = vadd.f32 0.0, %v871
        %873 = vdwg.mxu0
        %874 = vmatpush.msra.mxu0 %v370
        %875 = vmatpush.msra.mxu0 %v367
        %876 = vmatpush.msra.mxu0 %v364
        %877 = vmatpush.msra.mxu0 %v361
        %878 = vmatpush.msra.mxu0 %v358
        %879 = vmatpush.msra.mxu0 %v355
        %880 = vmatpush.msra.mxu0 %v352
        %881 = vmatpush.msra.mxu0 %v349
        %882 = vmatpush.msra.mxu0 %v346
        %883 = vmatpush.msra.mxu0 %v343
        %884 = vmatpush.msra.mxu0 %v340
        %885 = vmatpush.msra.mxu0 %v337
        %886 = vmatpush.msra.mxu0 %v334
        %887 = vmatpush.msra.mxu0 %v331
        %888 = vmatpush.msra.mxu0 %v328
        %889 = vmatpush.msra.mxu0 %v325
        %890 = vmatmul.f32.gmra.mxu0 %v228
        %v891 = vpop.f32.mrf.mxu0
        %v892 = vadd.f32 %v827, %v891
        %893 = vmatmul.f32.gmra.mxu0 %v231
        %v894 = vpop.f32.mrf.mxu0
        %v895 = vadd.f32 %v830, %v894
        %896 = vmatmul.f32.gmra.mxu0 %v234
        %v897 = vpop.f32.mrf.mxu0
        %v898 = vadd.f32 %v833, %v897
        %899 = vmatmul.f32.gmra.mxu0 %v237
        %v900 = vpop.f32.mrf.mxu0
        %v901 = vadd.f32 %v836, %v900
        %902 = vmatmul.f32.gmra.mxu0 %v240
        %v903 = vpop.f32.mrf.mxu0
        %v904 = vadd.f32 %v839, %v903
        %905 = vmatmul.f32.gmra.mxu0 %v243
        %v906 = vpop.f32.mrf.mxu0
        %v907 = vadd.f32 %v842, %v906
        %908 = vmatmul.f32.gmra.mxu0 %v246
        %v909 = vpop.f32.mrf.mxu0
        %v910 = vadd.f32 %v845, %v909
        %911 = vmatmul.f32.gmra.mxu0 %v249
        %v912 = vpop.f32.mrf.mxu0
        %v913 = vadd.f32 %v848, %v912
        %914 = vmatmul.f32.gmra.mxu0 %v252
        %v915 = vpop.f32.mrf.mxu0
        %v916 = vadd.f32 %v851, %v915
        %917 = vmatmul.f32.gmra.mxu0 %v255
        %v918 = vpop.f32.mrf.mxu0
        %v919 = vadd.f32 %v854, %v918
        %920 = vmatmul.f32.gmra.mxu0 %v258
        %v921 = vpop.f32.mrf.mxu0
        %v922 = vadd.f32 %v857, %v921
        %923 = vmatmul.f32.gmra.mxu0 %v261
        %v924 = vpop.f32.mrf.mxu0
        %v925 = vadd.f32 %v860, %v924
        %926 = vmatmul.f32.gmra.mxu0 %v264
        %v927 = vpop.f32.mrf.mxu0
        %v928 = vadd.f32 %v863, %v927
        %929 = vmatmul.f32.gmra.mxu0 %v267
        %v930 = vpop.f32.mrf.mxu0
        %v931 = vadd.f32 %v866, %v930
        %932 = vmatmul.f32.gmra.mxu0 %v270
        %v933 = vpop.f32.mrf.mxu0
        %v934 = vadd.f32 %v869, %v933
        %935 = vmatmul.f32.gmra.mxu0 %v273
        %v936 = vpop.f32.mrf.mxu0
        %v937 = vadd.f32 %v872, %v936
        %938 = vdwg.mxu0
        %939 = vmatpush.msra.mxu0 %v418
        %940 = vmatpush.msra.mxu0 %v415
        %941 = vmatpush.msra.mxu0 %v412
        %942 = vmatpush.msra.mxu0 %v409
        %943 = vmatpush.msra.mxu0 %v406
        %944 = vmatpush.msra.mxu0 %v403
        %945 = vmatpush.msra.mxu0 %v400
        %946 = vmatpush.msra.mxu0 %v397
        %947 = vmatpush.msra.mxu0 %v394
        %948 = vmatpush.msra.mxu0 %v391
        %949 = vmatpush.msra.mxu0 %v388
        %950 = vmatpush.msra.mxu0 %v385
        %951 = vmatpush.msra.mxu0 %v382
        %952 = vmatpush.msra.mxu0 %v379
        %953 = vmatpush.msra.mxu0 %v376
        %954 = vmatpush.msra.mxu0 %v373
        %955 = vmatmul.f32.gmra.mxu0 %v229
        %v956 = vpop.f32.mrf.mxu0
        %v957 = vadd.f32 %v892, %v956
        %958 = vmatmul.f32.gmra.mxu0 %v232
        %v959 = vpop.f32.mrf.mxu0
        %v960 = vadd.f32 %v895, %v959
        %961 = vmatmul.f32.gmra.mxu0 %v235
        %v962 = vpop.f32.mrf.mxu0
        %v963 = vadd.f32 %v898, %v962
        %964 = vmatmul.f32.gmra.mxu0 %v238
        %v965 = vpop.f32.mrf.mxu0
        %v966 = vadd.f32 %v901, %v965
        %967 = vmatmul.f32.gmra.mxu0 %v241
        %v968 = vpop.f32.mrf.mxu0
        %v969 = vadd.f32 %v904, %v968
        %970 = vmatmul.f32.gmra.mxu0 %v244
        %v971 = vpop.f32.mrf.mxu0
        %v972 = vadd.f32 %v907, %v971
        %973 = vmatmul.f32.gmra.mxu0 %v247
        %v974 = vpop.f32.mrf.mxu0
        %v975 = vadd.f32 %v910, %v974
        %976 = vmatmul.f32.gmra.mxu0 %v250
        %v977 = vpop.f32.mrf.mxu0
        %v978 = vadd.f32 %v913, %v977
        %979 = vmatmul.f32.gmra.mxu0 %v253
        %v980 = vpop.f32.mrf.mxu0
        %v981 = vadd.f32 %v916, %v980
        %982 = vmatmul.f32.gmra.mxu0 %v256
        %v983 = vpop.f32.mrf.mxu0
        %v984 = vadd.f32 %v919, %v983
        %985 = vmatmul.f32.gmra.mxu0 %v259
        %v986 = vpop.f32.mrf.mxu0
        %v987 = vadd.f32 %v922, %v986
        %988 = vmatmul.f32.gmra.mxu0 %v262
        %v989 = vpop.f32.mrf.mxu0
        %v990 = vadd.f32 %v925, %v989
        %991 = vmatmul.f32.gmra.mxu0 %v265
        %v992 = vpop.f32.mrf.mxu0
        %v993 = vadd.f32 %v928, %v992
        %994 = vmatmul.f32.gmra.mxu0 %v268
        %v995 = vpop.f32.mrf.mxu0
        %v996 = vadd.f32 %v931, %v995
        %997 = vmatmul.f32.gmra.mxu0 %v271
        %v998 = vpop.f32.mrf.mxu0
        %v999 = vadd.f32 %v934, %v998
        %1000 = vmatmul.f32.gmra.mxu0 %v274
        %v1001 = vpop.f32.mrf.mxu0
        %v1002 = vadd.f32 %v937, %v1001
        %1003 = vdwg.mxu0
        %v1004 = vld [vmem:[#allocation7] sm:$0xff]
        %v1005 = vld [vmem:[#allocation7 + $0x8] sm:$0xff]
        %v1006 = vld [vmem:[#allocation7 + $0x10] sm:$0xff]
        %v1007 = vld [vmem:[#allocation7 + $0x18] sm:$0xff]
        %v1008 = vld [vmem:[#allocation7 + $0x20] sm:$0xff]
        %v1009 = vld [vmem:[#allocation7 + $0x28] sm:$0xff]
        %v1010 = vld [vmem:[#allocation7 + $0x30] sm:$0xff]
        %v1011 = vld [vmem:[#allocation7 + $0x38] sm:$0xff]
        %v1012 = vld [vmem:[#allocation7 + $0x40] sm:$0xff]
        %v1013 = vld [vmem:[#allocation7 + $0x48] sm:$0xff]
        %v1014 = vld [vmem:[#allocation7 + $0x50] sm:$0xff]
        %v1015 = vld [vmem:[#allocation7 + $0x58] sm:$0xff]
        %v1016 = vld [vmem:[#allocation7 + $0x60] sm:$0xff]
        %v1017 = vld [vmem:[#allocation7 + $0x68] sm:$0xff]
        %v1018 = vld [vmem:[#allocation7 + $0x70] sm:$0xff]
        %v1019 = vld [vmem:[#allocation7 + $0x78] sm:$0xff]
        %1020 = vmatpush.xpose.msra.mxu0 %v807
        %1021 = vmatpush.xpose.msra.mxu0 %v804
        %1022 = vmatpush.xpose.msra.mxu0 %v801
        %1023 = vmatpush.xpose.msra.mxu0 %v798
        %1024 = vmatpush.xpose.msra.mxu0 %v795
        %1025 = vmatpush.xpose.msra.mxu0 %v792
        %1026 = vmatpush.xpose.msra.mxu0 %v789
        %1027 = vmatpush.xpose.msra.mxu0 %v786
        %1028 = vmatpush.xpose.msra.mxu0 %v783
        %1029 = vmatpush.xpose.msra.mxu0 %v780
        %1030 = vmatpush.xpose.msra.mxu0 %v777
        %1031 = vmatpush.xpose.msra.mxu0 %v774
        %1032 = vmatpush.xpose.msra.mxu0 %v771
        %1033 = vmatpush.xpose.msra.mxu0 %v768
        %1034 = vmatpush.xpose.msra.mxu0 %v765
        %1035 = vmatpush.xpose.msra.mxu0 %v762
        %1036 = vmatmul.f32.gmra.mxu0 %v567
        %v1037 = vpop.f32.mrf.mxu0
        %v1038 = vadd.f32 %v1004, %v1037
        %1039 = vmatmul.f32.gmra.mxu0 %v570
        %v1040 = vpop.f32.mrf.mxu0
        %v1041 = vadd.f32 %v1005, %v1040
        %1042 = vmatmul.f32.gmra.mxu0 %v573
        %v1043 = vpop.f32.mrf.mxu0
        %v1044 = vadd.f32 %v1006, %v1043
        %1045 = vmatmul.f32.gmra.mxu0 %v576
        %v1046 = vpop.f32.mrf.mxu0
        %v1047 = vadd.f32 %v1007, %v1046
        %1048 = vmatmul.f32.gmra.mxu0 %v579
        %v1049 = vpop.f32.mrf.mxu0
        %v1050 = vadd.f32 %v1008, %v1049
        %1051 = vmatmul.f32.gmra.mxu0 %v582
        %v1052 = vpop.f32.mrf.mxu0
        %v1053 = vadd.f32 %v1009, %v1052
        %1054 = vmatmul.f32.gmra.mxu0 %v585
        %v1055 = vpop.f32.mrf.mxu0
        %v1056 = vadd.f32 %v1010, %v1055
        %1057 = vmatmul.f32.gmra.mxu0 %v588
        %v1058 = vpop.f32.mrf.mxu0
        %v1059 = vadd.f32 %v1011, %v1058
        %1060 = vmatmul.f32.gmra.mxu0 %v591
        %v1061 = vpop.f32.mrf.mxu0
        %v1062 = vadd.f32 %v1012, %v1061
        %1063 = vmatmul.f32.gmra.mxu0 %v594
        %v1064 = vpop.f32.mrf.mxu0
        %v1065 = vadd.f32 %v1013, %v1064
        %1066 = vmatmul.f32.gmra.mxu0 %v597
        %v1067 = vpop.f32.mrf.mxu0
        %v1068 = vadd.f32 %v1014, %v1067
        %1069 = vmatmul.f32.gmra.mxu0 %v600
        %v1070 = vpop.f32.mrf.mxu0
        %v1071 = vadd.f32 %v1015, %v1070
        %1072 = vmatmul.f32.gmra.mxu0 %v603
        %v1073 = vpop.f32.mrf.mxu0
        %v1074 = vadd.f32 %v1016, %v1073
        %1075 = vmatmul.f32.gmra.mxu0 %v606
        %v1076 = vpop.f32.mrf.mxu0
        %v1077 = vadd.f32 %v1017, %v1076
        %1078 = vmatmul.f32.gmra.mxu0 %v609
        %v1079 = vpop.f32.mrf.mxu0
        %v1080 = vadd.f32 %v1018, %v1079
        %1081 = vmatmul.f32.gmra.mxu0 %v612
        %v1082 = vpop.f32.mrf.mxu0
        %v1083 = vadd.f32 %v1019, %v1082
        %1084 = vdwg.mxu0
        %1085 = vmax.xlane.f32.xlu0 %v1038
        %v1086 = vpop.xlane.xlu0 %1085
        %1087 = vmax.xlane.f32.xlu0 %v1041
        %v1088 = vpop.xlane.xlu0 %1087
        %1089 = vmax.xlane.f32.xlu0 %v1044
        %v1090 = vpop.xlane.xlu0 %1089
        %1091 = vmax.xlane.f32.xlu0 %v1047
        %v1092 = vpop.xlane.xlu0 %1091
        %1093 = vmax.xlane.f32.xlu0 %v1050
        %v1094 = vpop.xlane.xlu0 %1093
        %1095 = vmax.xlane.f32.xlu0 %v1053
        %v1096 = vpop.xlane.xlu0 %1095
        %1097 = vmax.xlane.f32.xlu0 %v1056
        %v1098 = vpop.xlane.xlu0 %1097
        %1099 = vmax.xlane.f32.xlu0 %v1059
        %v1100 = vpop.xlane.xlu0 %1099
        %1101 = vmax.xlane.f32.xlu0 %v1062
        %v1102 = vpop.xlane.xlu0 %1101
        %1103 = vmax.xlane.f32.xlu0 %v1065
        %v1104 = vpop.xlane.xlu0 %1103
        %1105 = vmax.xlane.f32.xlu0 %v1068
        %v1106 = vpop.xlane.xlu0 %1105
        %1107 = vmax.xlane.f32.xlu0 %v1071
        %v1108 = vpop.xlane.xlu0 %1107
        %1109 = vmax.xlane.f32.xlu0 %v1074
        %v1110 = vpop.xlane.xlu0 %1109
        %1111 = vmax.xlane.f32.xlu0 %v1077
        %v1112 = vpop.xlane.xlu0 %1111
        %1113 = vmax.xlane.f32.xlu0 %v1080
        %v1114 = vpop.xlane.xlu0 %1113
        %1115 = vmax.xlane.f32.xlu0 %v1083
        %v1116 = vpop.xlane.xlu0 %1115
        %v1117 = vsub.f32 %v1038, %v1086
        %v1118 = vsub.f32 %v1041, %v1088
        %v1119 = vsub.f32 %v1044, %v1090
        %v1120 = vsub.f32 %v1047, %v1092
        %v1121 = vsub.f32 %v1050, %v1094
        %v1122 = vsub.f32 %v1053, %v1096
        %v1123 = vsub.f32 %v1056, %v1098
        %v1124 = vsub.f32 %v1059, %v1100
        %v1125 = vsub.f32 %v1062, %v1102
        %v1126 = vsub.f32 %v1065, %v1104
        %v1127 = vsub.f32 %v1068, %v1106
        %v1128 = vsub.f32 %v1071, %v1108
        %v1129 = vsub.f32 %v1074, %v1110
        %v1130 = vsub.f32 %v1077, %v1112
        %v1131 = vsub.f32 %v1080, %v1114
        %v1132 = vsub.f32 %v1083, %v1116
        %v1133 = vmul.f32 %v1117, 1.442695
        %v1134 = vpow.pop %v1133
        %v1135 = vmul.f32 %v1118, 1.442695
        %v1136 = vpow.pop %v1135
        %v1137 = vmul.f32 %v1119, 1.442695
        %v1138 = vpow.pop %v1137
        %v1139 = vmul.f32 %v1120, 1.442695
        %v1140 = vpow.pop %v1139
        %v1141 = vmul.f32 %v1121, 1.442695
        %v1142 = vpow.pop %v1141
        %v1143 = vmul.f32 %v1122, 1.442695
        %v1144 = vpow.pop %v1143
        %v1145 = vmul.f32 %v1123, 1.442695
        %v1146 = vpow.pop %v1145
        %v1147 = vmul.f32 %v1124, 1.442695
        %v1148 = vpow.pop %v1147
        %v1149 = vmul.f32 %v1125, 1.442695
        %v1150 = vpow.pop %v1149
        %v1151 = vmul.f32 %v1126, 1.442695
        %v1152 = vpow.pop %v1151
        %v1153 = vmul.f32 %v1127, 1.442695
        %v1154 = vpow.pop %v1153
        %v1155 = vmul.f32 %v1128, 1.442695
        %v1156 = vpow.pop %v1155
        %v1157 = vmul.f32 %v1129, 1.442695
        %v1158 = vpow.pop %v1157
        %v1159 = vmul.f32 %v1130, 1.442695
        %v1160 = vpow.pop %v1159
        %v1161 = vmul.f32 %v1131, 1.442695
        %v1162 = vpow.pop %v1161
        %v1163 = vmul.f32 %v1132, 1.442695
        %v1164 = vpow.pop %v1163
        %1165 = vadd.xlane.f32.xlu0 %v1134
        %v1166 = vpop.xlane.xlu0 %1165
        %1167 = vadd.xlane.f32.xlu0 %v1136
        %v1168 = vpop.xlane.xlu0 %1167
        %1169 = vadd.xlane.f32.xlu0 %v1138
        %v1170 = vpop.xlane.xlu0 %1169
        %1171 = vadd.xlane.f32.xlu0 %v1140
        %v1172 = vpop.xlane.xlu0 %1171
        %1173 = vadd.xlane.f32.xlu0 %v1142
        %v1174 = vpop.xlane.xlu0 %1173
        %1175 = vadd.xlane.f32.xlu0 %v1144
        %v1176 = vpop.xlane.xlu0 %1175
        %1177 = vadd.xlane.f32.xlu0 %v1146
        %v1178 = vpop.xlane.xlu0 %1177
        %1179 = vadd.xlane.f32.xlu0 %v1148
        %v1180 = vpop.xlane.xlu0 %1179
        %1181 = vadd.xlane.f32.xlu0 %v1150
        %v1182 = vpop.xlane.xlu0 %1181
        %1183 = vadd.xlane.f32.xlu0 %v1152
        %v1184 = vpop.xlane.xlu0 %1183
        %1185 = vadd.xlane.f32.xlu0 %v1154
        %v1186 = vpop.xlane.xlu0 %1185
        %1187 = vadd.xlane.f32.xlu0 %v1156
        %v1188 = vpop.xlane.xlu0 %1187
        %1189 = vadd.xlane.f32.xlu0 %v1158
        %v1190 = vpop.xlane.xlu0 %1189
        %1191 = vadd.xlane.f32.xlu0 %v1160
        %v1192 = vpop.xlane.xlu0 %1191
        %1193 = vadd.xlane.f32.xlu0 %v1162
        %v1194 = vpop.xlane.xlu0 %1193
        %1195 = vadd.xlane.f32.xlu0 %v1164
        %v1196 = vpop.xlane.xlu0 %1195
        %v1197 = vrcp.pop %v1166
        %v1198 = vmul.f32 %v1166, %v1197
        %v1199 = vsub.f32 1.0, %v1198
        %v1200 = vmul.f32 %v1197, %v1199
        %v1201 = vadd.f32 %v1197, %v1200
        %vm1202 = vweird.f32 %v1166
        %vm1203 = vweird.f32 %v1197
        %vm1204 = vmor %vm1202, %vm1203
        %v1205 = vsel %vm1204, %v1197, %v1201
        %v1206 = vand.u32 2147483647, %v1166
        %vm1207 = vcmp.eq.f32.partialorder %v1206, 8.507059e+37
        %v1208 = vand.u32 %v1166, 2147483648
        %v1209 = vor.u32 1.1754944e-38, %v1208
        %v1210 = vsel %vm1207, %v1209, %v1205
        %v1211 = vmul.f32 %v1134, %v1210
        %v1212 = vrcp.pop %v1168
        %v1213 = vmul.f32 %v1168, %v1212
        %v1214 = vsub.f32 1.0, %v1213
        %v1215 = vmul.f32 %v1212, %v1214
        %v1216 = vadd.f32 %v1212, %v1215
        %vm1217 = vweird.f32 %v1168
        %vm1218 = vweird.f32 %v1212
        %vm1219 = vmor %vm1217, %vm1218
        %v1220 = vsel %vm1219, %v1212, %v1216
        %v1221 = vand.u32 2147483647, %v1168
        %vm1222 = vcmp.eq.f32.partialorder %v1221, 8.507059e+37
        %v1223 = vand.u32 %v1168, 2147483648
        %v1224 = vor.u32 1.1754944e-38, %v1223
        %v1225 = vsel %vm1222, %v1224, %v1220
        %v1226 = vmul.f32 %v1136, %v1225
        %v1227 = vrcp.pop %v1170
        %v1228 = vmul.f32 %v1170, %v1227
        %v1229 = vsub.f32 1.0, %v1228
        %v1230 = vmul.f32 %v1227, %v1229
        %v1231 = vadd.f32 %v1227, %v1230
        %vm1232 = vweird.f32 %v1170
        %vm1233 = vweird.f32 %v1227
        %vm1234 = vmor %vm1232, %vm1233
        %v1235 = vsel %vm1234, %v1227, %v1231
        %v1236 = vand.u32 2147483647, %v1170
        %vm1237 = vcmp.eq.f32.partialorder %v1236, 8.507059e+37
        %v1238 = vand.u32 %v1170, 2147483648
        %v1239 = vor.u32 1.1754944e-38, %v1238
        %v1240 = vsel %vm1237, %v1239, %v1235
        %v1241 = vmul.f32 %v1138, %v1240
        %v1242 = vrcp.pop %v1172
        %v1243 = vmul.f32 %v1172, %v1242
        %v1244 = vsub.f32 1.0, %v1243
        %v1245 = vmul.f32 %v1242, %v1244
        %v1246 = vadd.f32 %v1242, %v1245
        %vm1247 = vweird.f32 %v1172
        %vm1248 = vweird.f32 %v1242
        %vm1249 = vmor %vm1247, %vm1248
        %v1250 = vsel %vm1249, %v1242, %v1246
        %v1251 = vand.u32 2147483647, %v1172
        %vm1252 = vcmp.eq.f32.partialorder %v1251, 8.507059e+37
        %v1253 = vand.u32 %v1172, 2147483648
        %v1254 = vor.u32 1.1754944e-38, %v1253
        %v1255 = vsel %vm1252, %v1254, %v1250
        %v1256 = vmul.f32 %v1140, %v1255
        %v1257 = vrcp.pop %v1174
        %v1258 = vmul.f32 %v1174, %v1257
        %v1259 = vsub.f32 1.0, %v1258
        %v1260 = vmul.f32 %v1257, %v1259
        %v1261 = vadd.f32 %v1257, %v1260
        %vm1262 = vweird.f32 %v1174
        %vm1263 = vweird.f32 %v1257
        %vm1264 = vmor %vm1262, %vm1263
        %v1265 = vsel %vm1264, %v1257, %v1261
        %v1266 = vand.u32 2147483647, %v1174
        %vm1267 = vcmp.eq.f32.partialorder %v1266, 8.507059e+37
        %v1268 = vand.u32 %v1174, 2147483648
        %v1269 = vor.u32 1.1754944e-38, %v1268
        %v1270 = vsel %vm1267, %v1269, %v1265
        %v1271 = vmul.f32 %v1142, %v1270
        %v1272 = vrcp.pop %v1176
        %v1273 = vmul.f32 %v1176, %v1272
        %v1274 = vsub.f32 1.0, %v1273
        %v1275 = vmul.f32 %v1272, %v1274
        %v1276 = vadd.f32 %v1272, %v1275
        %vm1277 = vweird.f32 %v1176
        %vm1278 = vweird.f32 %v1272
        %vm1279 = vmor %vm1277, %vm1278
        %v1280 = vsel %vm1279, %v1272, %v1276
        %v1281 = vand.u32 2147483647, %v1176
        %vm1282 = vcmp.eq.f32.partialorder %v1281, 8.507059e+37
        %v1283 = vand.u32 %v1176, 2147483648
        %v1284 = vor.u32 1.1754944e-38, %v1283
        %v1285 = vsel %vm1282, %v1284, %v1280
        %v1286 = vmul.f32 %v1144, %v1285
        %v1287 = vrcp.pop %v1178
        %v1288 = vmul.f32 %v1178, %v1287
        %v1289 = vsub.f32 1.0, %v1288
        %v1290 = vmul.f32 %v1287, %v1289
        %v1291 = vadd.f32 %v1287, %v1290
        %vm1292 = vweird.f32 %v1178
        %vm1293 = vweird.f32 %v1287
        %vm1294 = vmor %vm1292, %vm1293
        %v1295 = vsel %vm1294, %v1287, %v1291
        %v1296 = vand.u32 2147483647, %v1178
        %vm1297 = vcmp.eq.f32.partialorder %v1296, 8.507059e+37
        %v1298 = vand.u32 %v1178, 2147483648
        %v1299 = vor.u32 1.1754944e-38, %v1298
        %v1300 = vsel %vm1297, %v1299, %v1295
        %v1301 = vmul.f32 %v1146, %v1300
        %v1302 = vrcp.pop %v1180
        %v1303 = vmul.f32 %v1180, %v1302
        %v1304 = vsub.f32 1.0, %v1303
        %v1305 = vmul.f32 %v1302, %v1304
        %v1306 = vadd.f32 %v1302, %v1305
        %vm1307 = vweird.f32 %v1180
        %vm1308 = vweird.f32 %v1302
        %vm1309 = vmor %vm1307, %vm1308
        %v1310 = vsel %vm1309, %v1302, %v1306
        %v1311 = vand.u32 2147483647, %v1180
        %vm1312 = vcmp.eq.f32.partialorder %v1311, 8.507059e+37
        %v1313 = vand.u32 %v1180, 2147483648
        %v1314 = vor.u32 1.1754944e-38, %v1313
        %v1315 = vsel %vm1312, %v1314, %v1310
        %v1316 = vmul.f32 %v1148, %v1315
        %v1317 = vrcp.pop %v1182
        %v1318 = vmul.f32 %v1182, %v1317
        %v1319 = vsub.f32 1.0, %v1318
        %v1320 = vmul.f32 %v1317, %v1319
        %v1321 = vadd.f32 %v1317, %v1320
        %vm1322 = vweird.f32 %v1182
        %vm1323 = vweird.f32 %v1317
        %vm1324 = vmor %vm1322, %vm1323
        %v1325 = vsel %vm1324, %v1317, %v1321
        %v1326 = vand.u32 2147483647, %v1182
        %vm1327 = vcmp.eq.f32.partialorder %v1326, 8.507059e+37
        %v1328 = vand.u32 %v1182, 2147483648
        %v1329 = vor.u32 1.1754944e-38, %v1328
        %v1330 = vsel %vm1327, %v1329, %v1325
        %v1331 = vmul.f32 %v1150, %v1330
        %v1332 = vrcp.pop %v1184
        %v1333 = vmul.f32 %v1184, %v1332
        %v1334 = vsub.f32 1.0, %v1333
        %v1335 = vmul.f32 %v1332, %v1334
        %v1336 = vadd.f32 %v1332, %v1335
        %vm1337 = vweird.f32 %v1184
        %vm1338 = vweird.f32 %v1332
        %vm1339 = vmor %vm1337, %vm1338
        %v1340 = vsel %vm1339, %v1332, %v1336
        %v1341 = vand.u32 2147483647, %v1184
        %vm1342 = vcmp.eq.f32.partialorder %v1341, 8.507059e+37
        %v1343 = vand.u32 %v1184, 2147483648
        %v1344 = vor.u32 1.1754944e-38, %v1343
        %v1345 = vsel %vm1342, %v1344, %v1340
        %v1346 = vmul.f32 %v1152, %v1345
        %v1347 = vrcp.pop %v1186
        %v1348 = vmul.f32 %v1186, %v1347
        %v1349 = vsub.f32 1.0, %v1348
        %v1350 = vmul.f32 %v1347, %v1349
        %v1351 = vadd.f32 %v1347, %v1350
        %vm1352 = vweird.f32 %v1186
        %vm1353 = vweird.f32 %v1347
        %vm1354 = vmor %vm1352, %vm1353
        %v1355 = vsel %vm1354, %v1347, %v1351
        %v1356 = vand.u32 2147483647, %v1186
        %vm1357 = vcmp.eq.f32.partialorder %v1356, 8.507059e+37
        %v1358 = vand.u32 %v1186, 2147483648
        %v1359 = vor.u32 1.1754944e-38, %v1358
        %v1360 = vsel %vm1357, %v1359, %v1355
        %v1361 = vmul.f32 %v1154, %v1360
        %v1362 = vrcp.pop %v1188
        %v1363 = vmul.f32 %v1188, %v1362
        %v1364 = vsub.f32 1.0, %v1363
        %v1365 = vmul.f32 %v1362, %v1364
        %v1366 = vadd.f32 %v1362, %v1365
        %vm1367 = vweird.f32 %v1188
        %vm1368 = vweird.f32 %v1362
        %vm1369 = vmor %vm1367, %vm1368
        %v1370 = vsel %vm1369, %v1362, %v1366
        %v1371 = vand.u32 2147483647, %v1188
        %vm1372 = vcmp.eq.f32.partialorder %v1371, 8.507059e+37
        %v1373 = vand.u32 %v1188, 2147483648
        %v1374 = vor.u32 1.1754944e-38, %v1373
        %v1375 = vsel %vm1372, %v1374, %v1370
        %v1376 = vmul.f32 %v1156, %v1375
        %v1377 = vrcp.pop %v1190
        %v1378 = vmul.f32 %v1190, %v1377
        %v1379 = vsub.f32 1.0, %v1378
        %v1380 = vmul.f32 %v1377, %v1379
        %v1381 = vadd.f32 %v1377, %v1380
        %vm1382 = vweird.f32 %v1190
        %vm1383 = vweird.f32 %v1377
        %vm1384 = vmor %vm1382, %vm1383
        %v1385 = vsel %vm1384, %v1377, %v1381
        %v1386 = vand.u32 2147483647, %v1190
        %vm1387 = vcmp.eq.f32.partialorder %v1386, 8.507059e+37
        %v1388 = vand.u32 %v1190, 2147483648
        %v1389 = vor.u32 1.1754944e-38, %v1388
        %v1390 = vsel %vm1387, %v1389, %v1385
        %v1391 = vmul.f32 %v1158, %v1390
        %v1392 = vrcp.pop %v1192
        %v1393 = vmul.f32 %v1192, %v1392
        %v1394 = vsub.f32 1.0, %v1393
        %v1395 = vmul.f32 %v1392, %v1394
        %v1396 = vadd.f32 %v1392, %v1395
        %vm1397 = vweird.f32 %v1192
        %vm1398 = vweird.f32 %v1392
        %vm1399 = vmor %vm1397, %vm1398
        %v1400 = vsel %vm1399, %v1392, %v1396
        %v1401 = vand.u32 2147483647, %v1192
        %vm1402 = vcmp.eq.f32.partialorder %v1401, 8.507059e+37
        %v1403 = vand.u32 %v1192, 2147483648
        %v1404 = vor.u32 1.1754944e-38, %v1403
        %v1405 = vsel %vm1402, %v1404, %v1400
        %v1406 = vmul.f32 %v1160, %v1405
        %v1407 = vrcp.pop %v1194
        %v1408 = vmul.f32 %v1194, %v1407
        %v1409 = vsub.f32 1.0, %v1408
        %v1410 = vmul.f32 %v1407, %v1409
        %v1411 = vadd.f32 %v1407, %v1410
        %vm1412 = vweird.f32 %v1194
        %vm1413 = vweird.f32 %v1407
        %vm1414 = vmor %vm1412, %vm1413
        %v1415 = vsel %vm1414, %v1407, %v1411
        %v1416 = vand.u32 2147483647, %v1194
        %vm1417 = vcmp.eq.f32.partialorder %v1416, 8.507059e+37
        %v1418 = vand.u32 %v1194, 2147483648
        %v1419 = vor.u32 1.1754944e-38, %v1418
        %v1420 = vsel %vm1417, %v1419, %v1415
        %v1421 = vmul.f32 %v1162, %v1420
        %v1422 = vrcp.pop %v1196
        %v1423 = vmul.f32 %v1196, %v1422
        %v1424 = vsub.f32 1.0, %v1423
        %v1425 = vmul.f32 %v1422, %v1424
        %v1426 = vadd.f32 %v1422, %v1425
        %vm1427 = vweird.f32 %v1196
        %vm1428 = vweird.f32 %v1422
        %vm1429 = vmor %vm1427, %vm1428
        %v1430 = vsel %vm1429, %v1422, %v1426
        %v1431 = vand.u32 2147483647, %v1196
        %vm1432 = vcmp.eq.f32.partialorder %v1431, 8.507059e+37
        %v1433 = vand.u32 %v1196, 2147483648
        %v1434 = vor.u32 1.1754944e-38, %v1433
        %v1435 = vsel %vm1432, %v1434, %v1430
        %v1436 = vmul.f32 %v1164, %v1435
        %1437 = vmatpush.msra.mxu0 %v1002
        %1438 = vmatpush.msra.mxu0 %v999
        %1439 = vmatpush.msra.mxu0 %v996
        %1440 = vmatpush.msra.mxu0 %v993
        %1441 = vmatpush.msra.mxu0 %v990
        %1442 = vmatpush.msra.mxu0 %v987
        %1443 = vmatpush.msra.mxu0 %v984
        %1444 = vmatpush.msra.mxu0 %v981
        %1445 = vmatpush.msra.mxu0 %v978
        %1446 = vmatpush.msra.mxu0 %v975
        %1447 = vmatpush.msra.mxu0 %v972
        %1448 = vmatpush.msra.mxu0 %v969
        %1449 = vmatpush.msra.mxu0 %v966
        %1450 = vmatpush.msra.mxu0 %v963
        %1451 = vmatpush.msra.mxu0 %v960
        %1452 = vmatpush.msra.mxu0 %v957
        %1453 = vmatmul.f32.gmra.mxu0 %v1211
        %v1454 = vpop.f32.mrf.mxu0
        %v1455 = vadd.f32 0.0, %v1454
        %1456 = vmatmul.f32.gmra.mxu0 %v1226
        %v1457 = vpop.f32.mrf.mxu0
        %v1458 = vadd.f32 0.0, %v1457
        %1459 = vmatmul.f32.gmra.mxu0 %v1241
        %v1460 = vpop.f32.mrf.mxu0
        %v1461 = vadd.f32 0.0, %v1460
        %1462 = vmatmul.f32.gmra.mxu0 %v1256
        %v1463 = vpop.f32.mrf.mxu0
        %v1464 = vadd.f32 0.0, %v1463
        %1465 = vmatmul.f32.gmra.mxu0 %v1271
        %v1466 = vpop.f32.mrf.mxu0
        %v1467 = vadd.f32 0.0, %v1466
        %1468 = vmatmul.f32.gmra.mxu0 %v1286
        %v1469 = vpop.f32.mrf.mxu0
        %v1470 = vadd.f32 0.0, %v1469
        %1471 = vmatmul.f32.gmra.mxu0 %v1301
        %v1472 = vpop.f32.mrf.mxu0
        %v1473 = vadd.f32 0.0, %v1472
        %1474 = vmatmul.f32.gmra.mxu0 %v1316
        %v1475 = vpop.f32.mrf.mxu0
        %v1476 = vadd.f32 0.0, %v1475
        %1477 = vmatmul.f32.gmra.mxu0 %v1331
        %v1478 = vpop.f32.mrf.mxu0
        %v1479 = vadd.f32 0.0, %v1478
        %1480 = vmatmul.f32.gmra.mxu0 %v1346
        %v1481 = vpop.f32.mrf.mxu0
        %v1482 = vadd.f32 0.0, %v1481
        %1483 = vmatmul.f32.gmra.mxu0 %v1361
        %v1484 = vpop.f32.mrf.mxu0
        %v1485 = vadd.f32 0.0, %v1484
        %1486 = vmatmul.f32.gmra.mxu0 %v1376
        %v1487 = vpop.f32.mrf.mxu0
        %v1488 = vadd.f32 0.0, %v1487
        %1489 = vmatmul.f32.gmra.mxu0 %v1391
        %v1490 = vpop.f32.mrf.mxu0
        %v1491 = vadd.f32 0.0, %v1490
        %1492 = vmatmul.f32.gmra.mxu0 %v1406
        %v1493 = vpop.f32.mrf.mxu0
        %v1494 = vadd.f32 0.0, %v1493
        %1495 = vmatmul.f32.gmra.mxu0 %v1421
        %v1496 = vpop.f32.mrf.mxu0
        %v1497 = vadd.f32 0.0, %v1496
        %1498 = vmatmul.f32.gmra.mxu0 %v1436
        %v1499 = vpop.f32.mrf.mxu0
        %v1500 = vadd.f32 0.0, %v1499
        %1501 = vdwg.mxu0
        %1502 = vst [vmem:[%s224] sm:$0xff] %v1455
        %1503 = vst [vmem:[%s224 + $0x8] sm:$0xff] %v1458
        %1504 = vst [vmem:[%s224 + $0x10] sm:$0xff] %v1461
        %1505 = vst [vmem:[%s224 + $0x18] sm:$0xff] %v1464
        %1506 = vst [vmem:[%s224 + $0x20] sm:$0xff] %v1467
        %1507 = vst [vmem:[%s224 + $0x28] sm:$0xff] %v1470
        %1508 = vst [vmem:[%s224 + $0x30] sm:$0xff] %v1473
        %1509 = vst [vmem:[%s224 + $0x38] sm:$0xff] %v1476
        %1510 = vst [vmem:[%s224 + $0x40] sm:$0xff] %v1479
        %1511 = vst [vmem:[%s224 + $0x48] sm:$0xff] %v1482
        %1512 = vst [vmem:[%s224 + $0x50] sm:$0xff] %v1485
        %1513 = vst [vmem:[%s224 + $0x58] sm:$0xff] %v1488
        %1514 = vst [vmem:[%s224 + $0x60] sm:$0xff] %v1491
        %1515 = vst [vmem:[%s224 + $0x68] sm:$0xff] %v1494
        %1516 = vst [vmem:[%s224 + $0x70] sm:$0xff] %v1497
        %1517 = vst [vmem:[%s224 + $0x78] sm:$0xff] %v1500
        %s1518 = sand.u32 %s97, 1
        %s1519 = scalar_lea.sflag [#allocation4], %s1518
        %s1520 = sand.u32 %s97, 1
        %s1521 = smul.addr %s1520, 128
        %s1522 = scalar_lea.vmem [#allocation8], %s1521
        // Predicated region
        $region45: #{tpu_custom_call.1} parent=31 // pred_check
          %p1523 = pneg %p107
        $region46: #{tpu_custom_call.1} parent=31 // pred_check_branch
          %1525 = sbr.rel (%p1523) target = $region48
        $region47: #{tpu_custom_call.1} parent=31 // pred_region
          %s1526 = smul.u32 4, %s21
          %1528 = vsyncadd %s1519, 0
          %s1529 = smul.addr %s1526, 4
          %s1530 = smul.addr %s1529, 8
          %s1531 = scalar_lea.hbm %s3, %s1530
          %s1532 = sshll.u32 %s1522, 4
          %s1533 = int_to_ptr.vmem [resolvable:$true] %s1532
          %s1534 = sshll.u32 %s1531, 4
          %s1535 = int_to_ptr.hbm [resolvable:$true] %s1534
          %1540 = dma.vmem_to_hbm [thread:$0]  %s1533, 2048, %s1535, %s1519, 128, 128, 8
        $region48: #{tpu_custom_call.1} parent=31 // pred_fallthru
          _
      $region32: #{tpu_custom_call.1} parent=5 // pred_fallthru
        _
      %p1541 = scmp.le.s32.totalorder 2, %s16
      // Predicated region
      $region49: #{tpu_custom_call.1} parent=5 // pred_check
        %p1542 = pneg %p1541
      $region50: #{tpu_custom_call.1} parent=5 // pred_check_branch
        %1544 = sbr.rel (%p1542) target = $region52
      $region51: #{tpu_custom_call.1} parent=5 // pred_region
        %s1545 = ssub.s32 %s16, 2
        // Predicated region
        $region53: #{tpu_custom_call.1} parent=51 // pred_check
          %p1546 = pneg %p113
        $region54: #{tpu_custom_call.1} parent=51 // pred_check_branch
          %1548 = sbr.rel (%p1546) target = $region56
        $region55: #{tpu_custom_call.1} parent=51 // pred_region
          %s1549 = sand.u32 %s98, 1
          %s1550 = scalar_lea.sflag [#allocation4], %s1549
          %s1551 = sand.u32 %s98, 1
          %s1552 = smul.addr %s1551, 128
          %s1553 = scalar_lea.vmem [#allocation8], %s1552
          %1555 = dma.done %s1550, 2048
        $region56: #{tpu_custom_call.1} parent=51 // pred_fallthru
          _
      $region52: #{tpu_custom_call.1} parent=5 // pred_fallthru
        _
    $region6: #{tpu_custom_call.1} parent=1 // loop_footer
      %s20 = sadd.s32 1, %s16
    $region7: #{tpu_custom_call.1} parent=1 // loop_footer_branch
      %15 = sbr.rel target = $region3
    $region8: #{tpu_custom_call.1} parent=1 // loop_exit
      _
    %1556 = vsyncpa [#allocation3], 1
    %s1557 = scalar_lea.sflag [#allocation3], 1
    %1558 = vsyncpa %s1557, 1
    %1559 = vsyncpa [#allocation6], 1
    %1560 = vsyncpa [#allocation4], 1
    %s1561 = scalar_lea.sflag [#allocation4], 1
    %1562 = vsyncpa %s1561, 1

</llo_original>
